<compile_context>
chip_gen: v7x
topology: tpu7x:2x2x1
jax: 0.10.0
libtpu: 0.0.40
codegen_flags: <defaults>
</compile_context>

<pallas_src>
import functools
import itertools

import jax
import jax.numpy as jnp
from jax import lax
from jax.experimental import pallas as pl
from jax.experimental.pallas import tpu as pltpu


def _attention_kernel(x_ref, wqkv_ref, bqkv_ref, bias_ref, o_ref, *,
                      batch, seq, num_heads, key_dim, d):
    """Fused qkv matmul + per-head attention; lane-dense (B, N, dh) output.

    x_ref     : (B*N, C)              bf16
    wqkv_ref  : (C, h)                bf16  columns grouped [Q_all | K_all | V_all],
                                            softmax scale pre-folded into Q columns
    bqkv_ref  : (1, h)                f32   (scale pre-folded into the Q bias part)
    bias_ref  : (num_heads, N, N)     f32   relative-position bias
    o_ref     : (B, N, num_heads*d)   f32   hardswish(attn @ v), heads concatenated
                                            along lanes (128-wide here, lane-dense)
    """
    x = x_ref[...]                                                      # (B*N, C) bf16

    # fused Linear_BN (qkv): bf16 MXU operands, f32 accumulate
    qkv = jnp.dot(x, wqkv_ref[...],
                  preferred_element_type=jnp.float32) + bqkv_ref[...]   # (B*N, h) f32
    qkv = qkv.reshape(batch, seq, -1).astype(jnp.bfloat16)              # single cast

    k_off = num_heads * key_dim
    v_off = 2 * num_heads * key_dim

    head_outs = []
    for hl in range(num_heads):            # short static per-head loop (unrolled)
        # lane slices taken exactly once per head (hoisted out of any batch loop)
        q = qkv[:, :, hl * key_dim:(hl + 1) * key_dim]                   # (B, N, kd)
        k = qkv[:, :, k_off + hl * key_dim:k_off + (hl + 1) * key_dim]   # (B, N, kd)
        v = qkv[:, :, v_off + hl * d:v_off + (hl + 1) * d]               # (B, N, d)

        # scores, batched over B (softmax scale already folded into Q columns)
        s = lax.dot_general(q, k, (((2,), (2,)), ((0,), (0,))),
                            preferred_element_type=jnp.float32)          # (B, N, N)
        s = s + bias_ref[hl][None]

        # numerically stable softmax (f32); denominator reciprocal on the EUP
        m = jnp.max(s, axis=-1, keepdims=True)
        p = jnp.exp(s - m)
        p = p * pl.reciprocal(jnp.sum(p, axis=-1, keepdims=True), approx=True)

        # attention output, batched over B
        o = lax.dot_general(p.astype(jnp.bfloat16), v,
                            (((2,), (1,)), ((0,), (0,))),
                            preferred_element_type=jnp.float32)          # (B, N, d)
        head_outs.append(o)

    out = jnp.concatenate(head_outs, axis=-1)                            # (B, N, dh) f32
    out = out * jnp.clip(out + 3.0, 0.0, 6.0) * (1.0 / 6.0)              # hardswish
    o_ref[...] = out.astype(o_ref.dtype)                                 # full-width vst


def attention_forward(x, wqkv, bqkv, attn_bias, wproj, bproj, *,
                      num_heads, key_dim, attn_ratio):
    """Pallas forward for the LeViT Attention block.

    Fused-weight layout (per-head interleaved, as produced by fuse_linear_bn):
      wqkv (C, h), bqkv (1, h), attn_bias (num_heads, N, N), wproj (dh, C), bproj (1, C).
    """
    B, N, C = x.shape
    d = int(attn_ratio * key_dim)
    dh = d * num_heads
    per_head = 2 * key_dim + d
    h = num_heads * per_head
    scale = key_dim ** (-0.5)

    # --- trace-time weight repacking (outside the kernel) ------------------------
    # Regroup qkv columns as [Q_all | K_all | V_all]; fold the softmax scale into Q.
    w3 = wqkv.reshape(C, num_heads, per_head)
    wq = (w3[:, :, :key_dim] * scale).reshape(C, num_heads * key_dim)
    wk = w3[:, :, key_dim:2 * key_dim].reshape(C, num_heads * key_dim)
    wv = w3[:, :, 2 * key_dim:].reshape(C, num_heads * d)
    wqkv_g = jnp.concatenate([wq, wk, wv], axis=-1).astype(jnp.bfloat16)   # (C, h)

    b3 = bqkv.reshape(num_heads, per_head)
    bq = (b3[:, :key_dim] * scale).reshape(1, num_heads * key_dim)
    bk = b3[:, key_dim:2 * key_dim].reshape(1, num_heads * key_dim)
    bv = b3[:, 2 * key_dim:].reshape(1, num_heads * d)
    bqkv_g = jnp.concatenate([bq, bk, bv], axis=-1)                        # (1, h) f32

    x_flat = x.reshape(B * N, C).astype(jnp.bfloat16)      # batch folded into M

    kernel = functools.partial(_attention_kernel, batch=B, seq=N,
                               num_heads=num_heads, key_dim=key_dim, d=d)

    heads_out = pl.pallas_call(
        kernel,
        out_shape=jax.ShapeDtypeStruct((B, N, dh), jnp.float32),
        grid_spec=pl.GridSpec(
            grid=(1,),
            in_specs=[
                pl.BlockSpec((B * N, C), lambda i: (0, 0)),           # x
                pl.BlockSpec((C, h), lambda i: (0, 0)),               # qkv weight
                pl.BlockSpec((1, h), lambda i: (0, 0)),               # qkv bias
                pl.BlockSpec((num_heads, N, N), lambda i: (0, 0, 0)), # attn bias
            ],
            out_specs=pl.BlockSpec((B, N, dh), lambda i: (0, 0, 0)),
        ),
    )(x_flat, wqkv_g, bqkv_g, attn_bias)

    # Tiny (dh -> C) projection + bias in XLA (fuses; keeps the kernel output
    # lane-dense instead of masked 32-lane stores).
    out = jnp.einsum("bnd,dc->bnc", heads_out, wproj) + bproj[0]
    return out.astype(x.dtype)


def fuse_linear_bn(w, gamma, beta, running_mean, running_var, eps=1e-5):
    """Linear (no bias, weight (out,in)) + BatchNorm1d (eval mode) fused into
    y = x @ W_f + b_f with W_f shape (in, out)."""
    s = gamma / jnp.sqrt(running_var + eps)
    w_fused = (w * s[:, None]).T            # (in, out)
    b_fused = beta - running_mean * s       # (out,)
    return w_fused, b_fused[None, :]


def build_attention_bias_idxs(resolution):
    points = list(itertools.product(range(resolution), range(resolution)))
    N = len(points)
    attention_offsets = {}
    idxs = []
    for p1 in points:
        for p2 in points:
            offset = (abs(p1[0] - p2[0]), abs(p1[1] - p2[1]))
            if offset not in attention_offsets:
                attention_offsets[offset] = len(attention_offsets)
            idxs.append(attention_offsets[offset])
    return jnp.array(idxs, dtype=jnp.int32).reshape(N, N), len(attention_offsets)


def reference_forward(x, wqkv, bqkv, attn_bias, wproj, bproj,
                      *, num_heads, key_dim, attn_ratio):
    """Pure-JAX f32 reference with module semantics (for validation)."""
    B, N, C = x.shape
    d = int(attn_ratio * key_dim)
    dh = d * num_heads
    scale = key_dim ** (-0.5)
    qkv = jnp.einsum("bnc,ch->bnh", x, wqkv) + bqkv[0]
    qkv = qkv.reshape(B, N, num_heads, 2 * key_dim + d)
    q, k, v = jnp.split(qkv, [key_dim, 2 * key_dim], axis=3)
    q = q.transpose(0, 2, 1, 3)
    k = k.transpose(0, 2, 1, 3)
    v = v.transpose(0, 2, 1, 3)
    attn = jnp.einsum("bhqd,bhkd->bhqk", q, k) * scale + attn_bias[None]
    attn = jax.nn.softmax(attn, axis=-1)
    out = jnp.einsum("bhqk,bhkd->bhqd", attn, v).transpose(0, 2, 1, 3).reshape(B, N, dh)
    out = out * jnp.clip(out + 3.0, 0.0, 6.0) / 6.0
    return jnp.einsum("bnd,dc->bnc", out, wproj) + bproj[0]


if __name__ == "__main__":
    # Module hyperparameters (small, consistent with the forward pass).
    B = 2
    resolution = 8
    N = resolution * resolution          # 64 tokens
    dim = 32                             # C
    key_dim = 16
    num_heads = 4
    attn_ratio = 2
    d = int(attn_ratio * key_dim)        # 32
    dh = d * num_heads                   # 128
    h = dh + 2 * key_dim * num_heads     # 256

    key = jax.random.PRNGKey(0)
    ks = jax.random.split(key, 12)

    x = jax.random.normal(ks[0], (B, N, dim), dtype=jnp.float32)

    # qkv Linear_BN params (deterministic random init; BN in eval mode, fused).
    w_qkv = jax.random.normal(ks[1], (h, dim), dtype=jnp.float32) * 0.05
    g_qkv = 1.0 + 0.1 * jax.random.normal(ks[2], (h,), dtype=jnp.float32)
    b_qkv = 0.1 * jax.random.normal(ks[3], (h,), dtype=jnp.float32)
    rm_qkv = 0.1 * jax.random.normal(ks[4], (h,), dtype=jnp.float32)
    rv_qkv = 1.0 + 0.1 * jax.random.uniform(ks[5], (h,), dtype=jnp.float32)
    wqkv_f, bqkv_f = fuse_linear_bn(w_qkv, g_qkv, b_qkv, rm_qkv, rv_qkv)

    # proj Linear_BN params (bn_weight_init=0 in the module; nonzero random gamma here
    # so the test output is non-trivial — semantics are identical).
    w_proj = jax.random.normal(ks[6], (dim, dh), dtype=jnp.float32) * 0.05
    g_proj = 0.5 + 0.1 * jax.random.normal(ks[7], (dim,), dtype=jnp.float32)
    b_proj = 0.1 * jax.random.normal(ks[8], (dim,), dtype=jnp.float32)
    rm_proj = 0.1 * jax.random.normal(ks[9], (dim,), dtype=jnp.float32)
    rv_proj = 1.0 + 0.1 * jax.random.uniform(ks[10], (dim,), dtype=jnp.float32)
    wproj_f, bproj_f = fuse_linear_bn(w_proj, g_proj, b_proj, rm_proj, rv_proj)

    # Relative-position attention biases, gathered per the LeViT index table.
    bias_idxs, n_offsets = build_attention_bias_idxs(resolution)
    attention_biases = 0.1 * jax.random.normal(
        ks[11], (num_heads, n_offsets), dtype=jnp.float32)
    attn_bias = attention_biases[:, bias_idxs]              # (num_heads, N, N)

    out = attention_forward(x, wqkv_f, bqkv_f, attn_bias, wproj_f, bproj_f,
                            num_heads=num_heads, key_dim=key_dim,
                            attn_ratio=attn_ratio)
    out = jax.block_until_ready(out)

    ref = reference_forward(x, wqkv_f, bqkv_f, attn_bias, wproj_f, bproj_f,
                            num_heads=num_heads, key_dim=key_dim,
                            attn_ratio=attn_ratio)
    assert out.shape == (B, N, dim)
    # bf16 MXU inputs + approx softmax reciprocal => loosened tolerance vs f32 reference.
    assert jnp.allclose(out, ref, atol=2e-2, rtol=2e-2)

    print("KERNEL_OK")
</pallas_src>

<mosaic_0001>
module attributes {stable_mosaic.version = 11 : i64} {
  func.func @_attention_kernel(%arg0: i32, %arg1: memref<128x32xbf16, #tpu.memory_space<vmem>>, %arg2: memref<32x256xbf16, #tpu.memory_space<vmem>>, %arg3: memref<1x256xf32, #tpu.memory_space<vmem>>, %arg4: memref<4x64x64xf32, #tpu.memory_space<vmem>>, %arg5: memref<2x64x128xf32, #tpu.memory_space<vmem>>) attributes {dimension_semantics = [#tpu.dimension_semantics<arbitrary>], iteration_bounds = array<i64: 1>, scalar_prefetch = 0 : i64, scratch_operands = 0 : i64, tpu.core_type = #tpu.core_type<tc>, window_params = [{pipeline_mode = #tpu.pipeline_mode<synchronous>, transform_indices = @transform_0, window_bounds = array<i64: 128, 32>}, {pipeline_mode = #tpu.pipeline_mode<synchronous>, transform_indices = @transform_1, window_bounds = array<i64: 32, 256>}, {pipeline_mode = #tpu.pipeline_mode<synchronous>, transform_indices = @transform_2, window_bounds = array<i64: 1, 256>}, {pipeline_mode = #tpu.pipeline_mode<synchronous>, transform_indices = @transform_3, window_bounds = array<i64: 4, 64, 64>}, {pipeline_mode = #tpu.pipeline_mode<synchronous>, transform_indices = @transform_4, window_bounds = array<i64: 2, 64, 128>}]} {
    %c0 = arith.constant 0 : index
    %c0_0 = arith.constant 0 : index
    %0 = vector.load %arg1[%c0, %c0_0] : memref<128x32xbf16, #tpu.memory_space<vmem>>, vector<128x32xbf16>
    %c0_1 = arith.constant 0 : index
    %c0_2 = arith.constant 0 : index
    %1 = vector.load %arg2[%c0_1, %c0_2] : memref<32x256xbf16, #tpu.memory_space<vmem>>, vector<32x256xbf16>
    %cst = arith.constant dense<0.000000e+00> : vector<128x256xf32>
    %2 = tpu.matmul %0, %1, %cst {dimension_numbers = #tpu.dot_dimension_numbers<[1], [0], [0], [1], [0, 0, 1, 1], [], []>} : vector<128x32xbf16>, vector<32x256xbf16>, vector<128x256xf32> -> vector<128x256xf32>
    %c0_3 = arith.constant 0 : index
    %c0_4 = arith.constant 0 : index
    %3 = vector.load %arg3[%c0_3, %c0_4] : memref<1x256xf32, #tpu.memory_space<vmem>>, vector<1x256xf32>
    %4 = vector.broadcast %3 : vector<1x256xf32> to vector<128x256xf32>
    %5 = arith.addf %2, %4 : vector<128x256xf32>
    %6 = vector.shape_cast %5 : vector<128x256xf32> to vector<2x64x256xf32>
    %7 = arith.truncf %6 : vector<2x64x256xf32> to vector<2x64x256xbf16>
    %8 = vector.extract_strided_slice %7 {offsets = [0, 0, 0], sizes = [2, 64, 16], strides = [1, 1, 1]} : vector<2x64x256xbf16> to vector<2x64x16xbf16>
    %9 = vector.extract_strided_slice %7 {offsets = [0, 0, 64], sizes = [2, 64, 16], strides = [1, 1, 1]} : vector<2x64x256xbf16> to vector<2x64x16xbf16>
    %10 = vector.extract_strided_slice %7 {offsets = [0, 0, 128], sizes = [2, 64, 32], strides = [1, 1, 1]} : vector<2x64x256xbf16> to vector<2x64x32xbf16>
    %cst_5 = arith.constant dense<0.000000e+00> : vector<2x64x64xf32>
    %11 = tpu.matmul %8, %9, %cst_5 {dimension_numbers = #tpu.dot_dimension_numbers<[2], [2], [1], [1], [0, 0, 0, 1, 1, 1], [0], [0]>} : vector<2x64x16xbf16>, vector<2x64x16xbf16>, vector<2x64x64xf32> -> vector<2x64x64xf32>
    %c0_6 = arith.constant 0 : index
    %c0_7 = arith.constant 0 : index
    %c0_8 = arith.constant 0 : index
    %12 = vector.load %arg4[%c0_6, %c0_7, %c0_8] : memref<4x64x64xf32, #tpu.memory_space<vmem>>, vector<1x64x64xf32>
    %13 = vector.shape_cast %12 : vector<1x64x64xf32> to vector<64x64xf32>
    %14 = vector.shape_cast %13 : vector<64x64xf32> to vector<1x64x64xf32>
    %15 = vector.broadcast %14 : vector<1x64x64xf32> to vector<2x64x64xf32>
    %16 = arith.addf %11, %15 : vector<2x64x64xf32>
    %cst_9 = arith.constant dense<0xFF800000> : vector<2x64xf32>
    %17 = vector.multi_reduction <maximumf>, %16, %cst_9 [2] : vector<2x64x64xf32> to vector<2x64xf32>
    %18 = vector.shape_cast %17 : vector<2x64xf32> to vector<2x64x1xf32>
    %19 = vector.broadcast %18 : vector<2x64x1xf32> to vector<2x64x64xf32>
    %20 = arith.subf %16, %19 : vector<2x64x64xf32>
    %21 = math.exp %20 : vector<2x64x64xf32>
    %cst_10 = arith.constant dense<0.000000e+00> : vector<2x64xf32>
    %22 = vector.multi_reduction <add>, %21, %cst_10 [2] : vector<2x64x64xf32> to vector<2x64xf32>
    %23 = vector.shape_cast %22 : vector<2x64xf32> to vector<2x64x1xf32>
    %24 = tpu.reciprocal %23 {approx = true} : vector<2x64x1xf32> -> vector<2x64x1xf32>
    %25 = vector.broadcast %24 : vector<2x64x1xf32> to vector<2x64x64xf32>
    %26 = arith.mulf %21, %25 : vector<2x64x64xf32>
    %27 = arith.truncf %26 : vector<2x64x64xf32> to vector<2x64x64xbf16>
    %cst_11 = arith.constant dense<0.000000e+00> : vector<2x64x32xf32>
    %28 = tpu.matmul %27, %10, %cst_11 {dimension_numbers = #tpu.dot_dimension_numbers<[2], [1], [1], [2], [0, 0, 0, 1, 1, 2], [0], [0]>} : vector<2x64x64xbf16>, vector<2x64x32xbf16>, vector<2x64x32xf32> -> vector<2x64x32xf32>
    %29 = vector.extract_strided_slice %7 {offsets = [0, 0, 16], sizes = [2, 64, 16], strides = [1, 1, 1]} : vector<2x64x256xbf16> to vector<2x64x16xbf16>
    %30 = vector.extract_strided_slice %7 {offsets = [0, 0, 80], sizes = [2, 64, 16], strides = [1, 1, 1]} : vector<2x64x256xbf16> to vector<2x64x16xbf16>
    %31 = vector.extract_strided_slice %7 {offsets = [0, 0, 160], sizes = [2, 64, 32], strides = [1, 1, 1]} : vector<2x64x256xbf16> to vector<2x64x32xbf16>
    %cst_12 = arith.constant dense<0.000000e+00> : vector<2x64x64xf32>
    %32 = tpu.matmul %29, %30, %cst_12 {dimension_numbers = #tpu.dot_dimension_numbers<[2], [2], [1], [1], [0, 0, 0, 1, 1, 1], [0], [0]>} : vector<2x64x16xbf16>, vector<2x64x16xbf16>, vector<2x64x64xf32> -> vector<2x64x64xf32>
    %c1 = arith.constant 1 : index
    %c0_13 = arith.constant 0 : index
    %c0_14 = arith.constant 0 : index
    %33 = vector.load %arg4[%c1, %c0_13, %c0_14] : memref<4x64x64xf32, #tpu.memory_space<vmem>>, vector<1x64x64xf32>
    %34 = vector.shape_cast %33 : vector<1x64x64xf32> to vector<64x64xf32>
    %35 = vector.shape_cast %34 : vector<64x64xf32> to vector<1x64x64xf32>
    %36 = vector.broadcast %35 : vector<1x64x64xf32> to vector<2x64x64xf32>
    %37 = arith.addf %32, %36 : vector<2x64x64xf32>
    %cst_15 = arith.constant dense<0xFF800000> : vector<2x64xf32>
    %38 = vector.multi_reduction <maximumf>, %37, %cst_15 [2] : vector<2x64x64xf32> to vector<2x64xf32>
    %39 = vector.shape_cast %38 : vector<2x64xf32> to vector<2x64x1xf32>
    %40 = vector.broadcast %39 : vector<2x64x1xf32> to vector<2x64x64xf32>
    %41 = arith.subf %37, %40 : vector<2x64x64xf32>
    %42 = math.exp %41 : vector<2x64x64xf32>
    %cst_16 = arith.constant dense<0.000000e+00> : vector<2x64xf32>
    %43 = vector.multi_reduction <add>, %42, %cst_16 [2] : vector<2x64x64xf32> to vector<2x64xf32>
    %44 = vector.shape_cast %43 : vector<2x64xf32> to vector<2x64x1xf32>
    %45 = tpu.reciprocal %44 {approx = true} : vector<2x64x1xf32> -> vector<2x64x1xf32>
    %46 = vector.broadcast %45 : vector<2x64x1xf32> to vector<2x64x64xf32>
    %47 = arith.mulf %42, %46 : vector<2x64x64xf32>
    %48 = arith.truncf %47 : vector<2x64x64xf32> to vector<2x64x64xbf16>
    %cst_17 = arith.constant dense<0.000000e+00> : vector<2x64x32xf32>
    %49 = tpu.matmul %48, %31, %cst_17 {dimension_numbers = #tpu.dot_dimension_numbers<[2], [1], [1], [2], [0, 0, 0, 1, 1, 2], [0], [0]>} : vector<2x64x64xbf16>, vector<2x64x32xbf16>, vector<2x64x32xf32> -> vector<2x64x32xf32>
    %50 = vector.extract_strided_slice %7 {offsets = [0, 0, 32], sizes = [2, 64, 16], strides = [1, 1, 1]} : vector<2x64x256xbf16> to vector<2x64x16xbf16>
    %51 = vector.extract_strided_slice %7 {offsets = [0, 0, 96], sizes = [2, 64, 16], strides = [1, 1, 1]} : vector<2x64x256xbf16> to vector<2x64x16xbf16>
    %52 = vector.extract_strided_slice %7 {offsets = [0, 0, 192], sizes = [2, 64, 32], strides = [1, 1, 1]} : vector<2x64x256xbf16> to vector<2x64x32xbf16>
    %cst_18 = arith.constant dense<0.000000e+00> : vector<2x64x64xf32>
    %53 = tpu.matmul %50, %51, %cst_18 {dimension_numbers = #tpu.dot_dimension_numbers<[2], [2], [1], [1], [0, 0, 0, 1, 1, 1], [0], [0]>} : vector<2x64x16xbf16>, vector<2x64x16xbf16>, vector<2x64x64xf32> -> vector<2x64x64xf32>
    %c2 = arith.constant 2 : index
    %c0_19 = arith.constant 0 : index
    %c0_20 = arith.constant 0 : index
    %54 = vector.load %arg4[%c2, %c0_19, %c0_20] : memref<4x64x64xf32, #tpu.memory_space<vmem>>, vector<1x64x64xf32>
    %55 = vector.shape_cast %54 : vector<1x64x64xf32> to vector<64x64xf32>
    %56 = vector.shape_cast %55 : vector<64x64xf32> to vector<1x64x64xf32>
    %57 = vector.broadcast %56 : vector<1x64x64xf32> to vector<2x64x64xf32>
    %58 = arith.addf %53, %57 : vector<2x64x64xf32>
    %cst_21 = arith.constant dense<0xFF800000> : vector<2x64xf32>
    %59 = vector.multi_reduction <maximumf>, %58, %cst_21 [2] : vector<2x64x64xf32> to vector<2x64xf32>
    %60 = vector.shape_cast %59 : vector<2x64xf32> to vector<2x64x1xf32>
    %61 = vector.broadcast %60 : vector<2x64x1xf32> to vector<2x64x64xf32>
    %62 = arith.subf %58, %61 : vector<2x64x64xf32>
    %63 = math.exp %62 : vector<2x64x64xf32>
    %cst_22 = arith.constant dense<0.000000e+00> : vector<2x64xf32>
    %64 = vector.multi_reduction <add>, %63, %cst_22 [2] : vector<2x64x64xf32> to vector<2x64xf32>
    %65 = vector.shape_cast %64 : vector<2x64xf32> to vector<2x64x1xf32>
    %66 = tpu.reciprocal %65 {approx = true} : vector<2x64x1xf32> -> vector<2x64x1xf32>
    %67 = vector.broadcast %66 : vector<2x64x1xf32> to vector<2x64x64xf32>
    %68 = arith.mulf %63, %67 : vector<2x64x64xf32>
    %69 = arith.truncf %68 : vector<2x64x64xf32> to vector<2x64x64xbf16>
    %cst_23 = arith.constant dense<0.000000e+00> : vector<2x64x32xf32>
    %70 = tpu.matmul %69, %52, %cst_23 {dimension_numbers = #tpu.dot_dimension_numbers<[2], [1], [1], [2], [0, 0, 0, 1, 1, 2], [0], [0]>} : vector<2x64x64xbf16>, vector<2x64x32xbf16>, vector<2x64x32xf32> -> vector<2x64x32xf32>
    %71 = vector.extract_strided_slice %7 {offsets = [0, 0, 48], sizes = [2, 64, 16], strides = [1, 1, 1]} : vector<2x64x256xbf16> to vector<2x64x16xbf16>
    %72 = vector.extract_strided_slice %7 {offsets = [0, 0, 112], sizes = [2, 64, 16], strides = [1, 1, 1]} : vector<2x64x256xbf16> to vector<2x64x16xbf16>
    %73 = vector.extract_strided_slice %7 {offsets = [0, 0, 224], sizes = [2, 64, 32], strides = [1, 1, 1]} : vector<2x64x256xbf16> to vector<2x64x32xbf16>
    %cst_24 = arith.constant dense<0.000000e+00> : vector<2x64x64xf32>
    %74 = tpu.matmul %71, %72, %cst_24 {dimension_numbers = #tpu.dot_dimension_numbers<[2], [2], [1], [1], [0, 0, 0, 1, 1, 1], [0], [0]>} : vector<2x64x16xbf16>, vector<2x64x16xbf16>, vector<2x64x64xf32> -> vector<2x64x64xf32>
    %c3 = arith.constant 3 : index
    %c0_25 = arith.constant 0 : index
    %c0_26 = arith.constant 0 : index
    %75 = vector.load %arg4[%c3, %c0_25, %c0_26] : memref<4x64x64xf32, #tpu.memory_space<vmem>>, vector<1x64x64xf32>
    %76 = vector.shape_cast %75 : vector<1x64x64xf32> to vector<64x64xf32>
    %77 = vector.shape_cast %76 : vector<64x64xf32> to vector<1x64x64xf32>
    %78 = vector.broadcast %77 : vector<1x64x64xf32> to vector<2x64x64xf32>
    %79 = arith.addf %74, %78 : vector<2x64x64xf32>
    %cst_27 = arith.constant dense<0xFF800000> : vector<2x64xf32>
    %80 = vector.multi_reduction <maximumf>, %79, %cst_27 [2] : vector<2x64x64xf32> to vector<2x64xf32>
    %81 = vector.shape_cast %80 : vector<2x64xf32> to vector<2x64x1xf32>
    %82 = vector.broadcast %81 : vector<2x64x1xf32> to vector<2x64x64xf32>
    %83 = arith.subf %79, %82 : vector<2x64x64xf32>
    %84 = math.exp %83 : vector<2x64x64xf32>
    %cst_28 = arith.constant dense<0.000000e+00> : vector<2x64xf32>
    %85 = vector.multi_reduction <add>, %84, %cst_28 [2] : vector<2x64x64xf32> to vector<2x64xf32>
    %86 = vector.shape_cast %85 : vector<2x64xf32> to vector<2x64x1xf32>
    %87 = tpu.reciprocal %86 {approx = true} : vector<2x64x1xf32> -> vector<2x64x1xf32>
    %88 = vector.broadcast %87 : vector<2x64x1xf32> to vector<2x64x64xf32>
    %89 = arith.mulf %84, %88 : vector<2x64x64xf32>
    %90 = arith.truncf %89 : vector<2x64x64xf32> to vector<2x64x64xbf16>
    %cst_29 = arith.constant dense<0.000000e+00> : vector<2x64x32xf32>
    %91 = tpu.matmul %90, %73, %cst_29 {dimension_numbers = #tpu.dot_dimension_numbers<[2], [1], [1], [2], [0, 0, 0, 1, 1, 2], [0], [0]>} : vector<2x64x64xbf16>, vector<2x64x32xbf16>, vector<2x64x32xf32> -> vector<2x64x32xf32>
    %92 = tpu.concatenate %28, %49, %70, %91 in 2 : vector<2x64x32xf32>, vector<2x64x32xf32>, vector<2x64x32xf32>, vector<2x64x32xf32> -> vector<2x64x128xf32>
    %cst_30 = arith.constant 3.000000e+00 : f32
    %93 = vector.broadcast %cst_30 : f32 to vector<2x64x128xf32>
    %94 = arith.addf %92, %93 : vector<2x64x128xf32>
    %cst_31 = arith.constant 0.000000e+00 : f32
    %cst_32 = arith.constant 6.000000e+00 : f32
    %95 = vector.broadcast %cst_31 : f32 to vector<2x64x128xf32>
    %96 = arith.maximumf %95, %94 : vector<2x64x128xf32>
    %97 = vector.broadcast %cst_32 : f32 to vector<2x64x128xf32>
    %98 = arith.minimumf %97, %96 : vector<2x64x128xf32>
    %99 = arith.mulf %92, %98 : vector<2x64x128xf32>
    %cst_33 = arith.constant 0.166666672 : f32
    %100 = vector.broadcast %cst_33 : f32 to vector<2x64x128xf32>
    %101 = arith.mulf %99, %100 : vector<2x64x128xf32>
    %c0_34 = arith.constant 0 : index
    %c0_35 = arith.constant 0 : index
    %c0_36 = arith.constant 0 : index
    %102 = vector.load %arg5[%c0_34, %c0_35, %c0_36] : memref<2x64x128xf32, #tpu.memory_space<vmem>>, vector<2x64x128xf32>
    tpu.vector_store %arg5[%c0_34, %c0_35, %c0_36], %101 {strides = array<i32>} : memref<2x64x128xf32, #tpu.memory_space<vmem>>, vector<2x64x128xf32>,
    return
  }
  func.func @transform_0(%arg0: i32) -> (i32, i32) {
    %c0_i32 = arith.constant 0 : i32
    %c0_i32_0 = arith.constant 0 : i32
    %c0_i32_1 = arith.constant 0 : i32
    return %c0_i32, %c0_i32_0 : i32, i32
  }
  func.func @transform_1(%arg0: i32) -> (i32, i32) {
    %c0_i32 = arith.constant 0 : i32
    %c0_i32_0 = arith.constant 0 : i32
    %c0_i32_1 = arith.constant 0 : i32
    return %c0_i32, %c0_i32_0 : i32, i32
  }
  func.func @transform_2(%arg0: i32) -> (i32, i32) {
    %c0_i32 = arith.constant 0 : i32
    %c0_i32_0 = arith.constant 0 : i32
    %c0_i32_1 = arith.constant 0 : i32
    return %c0_i32, %c0_i32_0 : i32, i32
  }
  func.func @transform_3(%arg0: i32) -> (i32, i32, i32) {
    %c0_i32 = arith.constant 0 : i32
    %c0_i32_0 = arith.constant 0 : i32
    %c0_i32_1 = arith.constant 0 : i32
    %c0_i32_2 = arith.constant 0 : i32
    return %c0_i32, %c0_i32_0, %c0_i32_1 : i32, i32, i32
  }
  func.func @transform_4(%arg0: i32) -> (i32, i32, i32) {
    %c0_i32 = arith.constant 0 : i32
    %c0_i32_0 = arith.constant 0 : i32
    %c0_i32_1 = arith.constant 0 : i32
    %c0_i32_2 = arith.constant 0 : i32
    return %c0_i32, %c0_i32_0, %c0_i32_1 : i32, i32, i32
  }
}

</mosaic_0001>

<llo_original>
// kernel: tpu_custom_call.1
$region0: #{tpu_custom_call.1}
  #allocation0 [shape = 'u32[]', space=smem, size = 0x4, offset = 0x4, fixed_abs, tag = 'smem constant byte address 0x4 - core index']
  #allocation1 [shape = 'u32[144,128]{1,0:T(1,128)}', space=vmem, size = 0x12000, scoped, tag = 'internal scratch']
  %s0 = inlined_call_operand.vmem [shape: bf16[128,32], index: 0, kind: input, shape index: {}]
  %s1 = inlined_call_operand.vmem [shape: bf16[32,256], index: 1, kind: input, shape index: {}]
  %s2 = inlined_call_operand.vmem [shape: f32[1,256], index: 2, kind: input, shape index: {}]
  %s3 = inlined_call_operand.hbm [shape: f32[4,64,64], index: 3, kind: input, shape index: {}]
  %s4 = inlined_call_operand.hbm [shape: f32[2,64,128], index: 4, kind: output, shape index: {}]
  %s5 = sld [smem:[#allocation0]]
  $region30: #{tpu_custom_call.1} parent=0
    _
  %s7 = ssub.s32 1, %s5
  %s8 = scalar_select 0, %s7, %s5
  $region1: #{tpu_custom_call.1} parent=0
    #allocation2 [shape = 'u8[131072]{0}', space=vmem, size = 0x20000, scoped, tag = 'input window, operand 3, single buffered']
    #allocation3 [shape = 's32[1]{0}', space=sflag, size = 0x4, scoped, tag = 'scoped memory for tpu_custom_call.1']
    #allocation4 [shape = 's32[1]{0}', space=sflag, size = 0x4, scoped, tag = 'scoped memory for tpu_custom_call.1']
    #allocation5 [shape = 'u8[65536]{0}', space=vmem, size = 0x10000, scoped, tag = 'output window, operand 0, single buffered']
    %9 = vsyncpa [#allocation3], 0
    %10 = vsyncpa [#allocation4], 0
    // Predicated region
    $region2: #{tpu_custom_call.1} parent=1 // pred_check
      _
    $region3: #{tpu_custom_call.1} parent=1 // pred_check_branch
      %12 = sbr.rel (0) target = $region5
    $region4: #{tpu_custom_call.1} parent=1 // pred_region
      _
    $region5: #{tpu_custom_call.1} parent=1 // pred_fallthru
      _
    // Predicated region
    $region6: #{tpu_custom_call.1} parent=1 // pred_check
      _
    $region7: #{tpu_custom_call.1} parent=1 // pred_check_branch
      %14 = sbr.rel (0) target = $region9
    $region8: #{tpu_custom_call.1} parent=1 // pred_region
      _
    $region9: #{tpu_custom_call.1} parent=1 // pred_fallthru
      _
    // Predicated region
    $region10: #{tpu_custom_call.1} parent=1 // pred_check
      _
    $region11: #{tpu_custom_call.1} parent=1 // pred_check_branch
      %16 = sbr.rel (0) target = $region13
    $region12: #{tpu_custom_call.1} parent=1 // pred_region
      _
    $region13: #{tpu_custom_call.1} parent=1 // pred_fallthru
      _
    // Predicated region
    $region14: #{tpu_custom_call.1} parent=1 // pred_check
      _
    $region15: #{tpu_custom_call.1} parent=1 // pred_check_branch
      %18 = sbr.rel (0) target = $region17
    $region16: #{tpu_custom_call.1} parent=1 // pred_region
      %s20 = ssub.s32 4096, 4096
      %21 = vsyncadd [#allocation3], %s20
      %s22 = sshll.u32 [#allocation2], 4
      %s23 = int_to_ptr.vmem [resolvable:$true] %s22
      %28 = dma.hbm_to_vmem [thread:$0]  %s3, 4096, %s23, [#allocation3], 128, 128, 8
    $region17: #{tpu_custom_call.1} parent=1 // pred_fallthru
      _
    // Predicated region
    $region18: #{tpu_custom_call.1} parent=1 // pred_check
      _
    $region19: #{tpu_custom_call.1} parent=1 // pred_check_branch
      %30 = sbr.rel (0) target = $region21
    $region20: #{tpu_custom_call.1} parent=1 // pred_region
      %31 = dma.done [#allocation3], 4096
    $region21: #{tpu_custom_call.1} parent=1 // pred_fallthru
      _
    %v33 = vld [vmem:[%s0] sm:$0xf]
    %v34 = vld [vmem:[%s0 + $0x4] sm:$0xf]
    %v35 = vld [vmem:[%s0 + $0x8] sm:$0xf]
    %v36 = vld [vmem:[%s0 + $0xc] sm:$0xf]
    %v37 = vld [vmem:[%s0 + $0x10] sm:$0xf]
    %v38 = vld [vmem:[%s0 + $0x14] sm:$0xf]
    %v39 = vld [vmem:[%s0 + $0x18] sm:$0xf]
    %v40 = vld [vmem:[%s0 + $0x1c] sm:$0xf]
    %v41 = vld [vmem:[%s0 + $0x20] sm:$0xf]
    %v42 = vld [vmem:[%s0 + $0x24] sm:$0xf]
    %v43 = vld [vmem:[%s0 + $0x28] sm:$0xf]
    %v44 = vld [vmem:[%s0 + $0x2c] sm:$0xf]
    %v45 = vld [vmem:[%s0 + $0x30] sm:$0xf]
    %v46 = vld [vmem:[%s0 + $0x34] sm:$0xf]
    %v47 = vld [vmem:[%s0 + $0x38] sm:$0xf]
    %v48 = vld [vmem:[%s0 + $0x3c] sm:$0xf]
    %v49 = vld [vmem:[%s1] sm:$0xff]
    %v50 = vld [vmem:[%s1 + $0x8] sm:$0xff]
    %v51 = vld [vmem:[%s1 + $0x10] sm:$0xff]
    %v52 = vld [vmem:[%s1 + $0x18] sm:$0xff]
    %v53 = vld [vmem:[%s2] sm:$0x3]
    %v55 = vlaneseq
    %v56 = vshrl.u32 %v55, 7
    %v57 = vsub.s32 0, %v56
    %v58 = vrot.slane %v53, %v57
    %v59 = vlaneseq
    %v60 = vshrl.u32 %v59, 7
    %v61 = vsub.s32 1, %v60
    %v62 = vrot.slane %v53, %v61
    %v81 = vunpack.c.l.b16 %v33
    %v82 = vunpack.c.l.b16 %v34
    %v83 = vunpack.c.l.b16 %v35
    %v84 = vunpack.c.l.b16 %v36
    %v85 = vunpack.c.l.b16 %v37
    %v86 = vunpack.c.l.b16 %v38
    %v87 = vunpack.c.l.b16 %v39
    %v88 = vunpack.c.l.b16 %v40
    %v89 = vunpack.c.l.b16 %v41
    %v90 = vunpack.c.l.b16 %v42
    %v91 = vunpack.c.l.b16 %v43
    %v92 = vunpack.c.l.b16 %v44
    %v93 = vunpack.c.l.b16 %v45
    %v94 = vunpack.c.l.b16 %v46
    %v95 = vunpack.c.l.b16 %v47
    %v96 = vunpack.c.l.b16 %v48
    %v97 = vpack.c.b16 %v82, %v81
    %v98 = vpack.c.b16 %v84, %v83
    %v99 = vpack.c.b16 %v86, %v85
    %v100 = vpack.c.b16 %v88, %v87
    %v101 = vpack.c.b16 %v90, %v89
    %v102 = vpack.c.b16 %v92, %v91
    %v103 = vpack.c.b16 %v94, %v93
    %v104 = vpack.c.b16 %v96, %v95
    %v109 = vunpack.c.l.b16 %v49
    %v110 = vunpack.c.h.b16 %v49
    %v111 = vunpack.c.l.b16 %v50
    %v112 = vunpack.c.h.b16 %v50
    %v113 = vunpack.c.l.b16 %v51
    %v114 = vunpack.c.h.b16 %v51
    %v115 = vunpack.c.l.b16 %v52
    %v116 = vunpack.c.h.b16 %v52
    %v117 = vpack.c.b16 %v111, %v109
    %v118 = vpack.c.b16 %v112, %v110
    %v119 = vpack.c.b16 %v115, %v113
    %v120 = vpack.c.b16 %v116, %v114
    %vm125 = vcmask 261120
    %v127 = vsel %vm125, %v97, 0
    %v130 = vsel %vm125, %v98, 0
    %v133 = vsel %vm125, %v99, 0
    %v136 = vsel %vm125, %v100, 0
    %v139 = vsel %vm125, %v101, 0
    %v142 = vsel %vm125, %v102, 0
    %v145 = vsel %vm125, %v103, 0
    %v148 = vsel %vm125, %v104, 0
    %150 = vmatprep.subr.bf16.mxu0 %v118
    %151 = vmatpush1.bf16.msra.mxu0 %v117
    %152 = vmatprep.subr.bf16.mxu0 %v120
    %153 = vmatpush1.bf16.msra.mxu0 %v119
    %154 = vmatprep.subr.bf16.mxu0 0
    %155 = vmatpush1.bf16.msra.mxu0 0
    %156 = vmatprep.subr.bf16.mxu0 0
    %157 = vmatpush1.bf16.msra.mxu0 0
    %158 = vmatprep.subr.bf16.mxu0 0
    %159 = vmatpush1.bf16.msra.mxu0 0
    %160 = vmatprep.subr.bf16.mxu0 0
    %161 = vmatpush1.bf16.msra.mxu0 0
    %162 = vmatprep.subr.bf16.mxu0 0
    %163 = vmatpush1.bf16.msra.mxu0 0
    %164 = vmatprep.subr.bf16.mxu0 0
    %165 = vmatpush1.bf16.msra.mxu0 0
    %166 = vmatprep.subr.bf16.mxu0 0
    %167 = vmatpush1.bf16.msra.mxu0 0
    %168 = vmatprep.subr.bf16.mxu0 0
    %169 = vmatpush1.bf16.msra.mxu0 0
    %170 = vmatprep.subr.bf16.mxu0 0
    %171 = vmatpush1.bf16.msra.mxu0 0
    %172 = vmatprep.subr.bf16.mxu0 0
    %173 = vmatpush1.bf16.msra.mxu0 0
    %174 = vmatprep.subr.bf16.mxu0 0
    %175 = vmatpush1.bf16.msra.mxu0 0
    %176 = vmatprep.subr.bf16.mxu0 0
    %177 = vmatpush1.bf16.msra.mxu0 0
    %178 = vmatprep.subr.bf16.mxu0 0
    %179 = vmatpush1.bf16.msra.mxu0 0
    %180 = vmatprep.subr.bf16.mxu0 0
    %181 = vmatpush1.bf16.msra.mxu0 0
    %182 = vmatprep.mubr.bf16.mxu0 0
    %183 = vmatmul.mubr.bf16.gmra.mrb[0].mxu0 %v127
    %v184 = vpop.f32.mrb[0].mxu0
    %v185 = vadd.f32 %v58, %v184
    %v186 = vpop.f32.mrb[0].mxu0
    %v187 = vadd.f32 %v62, %v186
    %v188 = vpop.f32.mrb[0].mxu0
    %v189 = vadd.f32 %v58, %v188
    %v190 = vpop.f32.mrb[0].mxu0
    %v191 = vadd.f32 %v62, %v190
    %192 = vmatprep.mubr.bf16.mxu0 0
    %193 = vmatmul.mubr.bf16.gmra.mrb[0].mxu0 %v130
    %v194 = vpop.f32.mrb[0].mxu0
    %v195 = vadd.f32 %v58, %v194
    %v196 = vpop.f32.mrb[0].mxu0
    %v197 = vadd.f32 %v62, %v196
    %v198 = vpop.f32.mrb[0].mxu0
    %v199 = vadd.f32 %v58, %v198
    %v200 = vpop.f32.mrb[0].mxu0
    %v201 = vadd.f32 %v62, %v200
    %202 = vmatprep.mubr.bf16.mxu0 0
    %203 = vmatmul.mubr.bf16.gmra.mrb[0].mxu0 %v133
    %v204 = vpop.f32.mrb[0].mxu0
    %v205 = vadd.f32 %v58, %v204
    %v206 = vpop.f32.mrb[0].mxu0
    %v207 = vadd.f32 %v62, %v206
    %v208 = vpop.f32.mrb[0].mxu0
    %v209 = vadd.f32 %v58, %v208
    %v210 = vpop.f32.mrb[0].mxu0
    %v211 = vadd.f32 %v62, %v210
    %212 = vmatprep.mubr.bf16.mxu0 0
    %213 = vmatmul.mubr.bf16.gmra.mrb[0].mxu0 %v136
    %v214 = vpop.f32.mrb[0].mxu0
    %v215 = vadd.f32 %v58, %v214
    %v216 = vpop.f32.mrb[0].mxu0
    %v217 = vadd.f32 %v62, %v216
    %v218 = vpop.f32.mrb[0].mxu0
    %v219 = vadd.f32 %v58, %v218
    %v220 = vpop.f32.mrb[0].mxu0
    %v221 = vadd.f32 %v62, %v220
    %222 = vmatprep.mubr.bf16.mxu0 0
    %223 = vmatmul.mubr.bf16.gmra.mrb[0].mxu0 %v139
    %v224 = vpop.f32.mrb[0].mxu0
    %v225 = vadd.f32 %v58, %v224
    %v226 = vpop.f32.mrb[0].mxu0
    %v227 = vadd.f32 %v62, %v226
    %v228 = vpop.f32.mrb[0].mxu0
    %v229 = vadd.f32 %v58, %v228
    %v230 = vpop.f32.mrb[0].mxu0
    %v231 = vadd.f32 %v62, %v230
    %232 = vmatprep.mubr.bf16.mxu0 0
    %233 = vmatmul.mubr.bf16.gmra.mrb[0].mxu0 %v142
    %v234 = vpop.f32.mrb[0].mxu0
    %v235 = vadd.f32 %v58, %v234
    %v236 = vpop.f32.mrb[0].mxu0
    %v237 = vadd.f32 %v62, %v236
    %v238 = vpop.f32.mrb[0].mxu0
    %v239 = vadd.f32 %v58, %v238
    %v240 = vpop.f32.mrb[0].mxu0
    %v241 = vadd.f32 %v62, %v240
    %242 = vmatprep.mubr.bf16.mxu0 0
    %243 = vmatmul.mubr.bf16.gmra.mrb[0].mxu0 %v145
    %v244 = vpop.f32.mrb[0].mxu0
    %v245 = vadd.f32 %v58, %v244
    %v246 = vpop.f32.mrb[0].mxu0
    %v247 = vadd.f32 %v62, %v246
    %v248 = vpop.f32.mrb[0].mxu0
    %v249 = vadd.f32 %v58, %v248
    %v250 = vpop.f32.mrb[0].mxu0
    %v251 = vadd.f32 %v62, %v250
    %252 = vmatprep.mubr.bf16.mxu0 0
    %253 = vmatmul.mubr.bf16.gmra.mrb[0].mxu0 %v148
    %v254 = vpop.f32.mrb[0].mxu0
    %v255 = vadd.f32 %v58, %v254
    %v256 = vpop.f32.mrb[0].mxu0
    %v257 = vadd.f32 %v62, %v256
    %v258 = vpop.f32.mrb[0].mxu0
    %v259 = vadd.f32 %v58, %v258
    %v260 = vpop.f32.mrb[0].mxu0
    %v261 = vadd.f32 %v62, %v260
    %262 = vdwg.mxu0
    %v263 = vpack.c.bf16 %v189, %v185
    %v264 = vpack.c.bf16 %v191, %v187
    %v265 = vpack.c.bf16 %v199, %v195
    %v266 = vpack.c.bf16 %v201, %v197
    %v267 = vpack.c.bf16 %v209, %v205
    %v268 = vpack.c.bf16 %v211, %v207
    %v269 = vpack.c.bf16 %v219, %v215
    %v270 = vpack.c.bf16 %v221, %v217
    %v271 = vpack.c.bf16 %v229, %v225
    %v272 = vpack.c.bf16 %v231, %v227
    %v273 = vpack.c.bf16 %v239, %v235
    %v274 = vpack.c.bf16 %v241, %v237
    %v275 = vpack.c.bf16 %v249, %v245
    %v276 = vpack.c.bf16 %v251, %v247
    %v277 = vpack.c.bf16 %v259, %v255
    %v278 = vpack.c.bf16 %v261, %v257
    %v279 = vld [vmem:[#allocation2] sm:$0xff]
    %v280 = vld [vmem:[#allocation2 + $0x8] sm:$0xff]
    %v281 = vld [vmem:[#allocation2 + $0x10] sm:$0xff]
    %v282 = vld [vmem:[#allocation2 + $0x18] sm:$0xff]
    %v283 = vld [vmem:[#allocation2 + $0x20] sm:$0xff]
    %v284 = vld [vmem:[#allocation2 + $0x28] sm:$0xff]
    %v285 = vld [vmem:[#allocation2 + $0x30] sm:$0xff]
    %v286 = vld [vmem:[#allocation2 + $0x38] sm:$0xff]
    %291 = vrot.lane.b32.xlu0 %v263, 64
    %v292 = vpop.permute.xlu0 %291
    %293 = vrot.lane.b32.xlu0 %v265, 64
    %v294 = vpop.permute.xlu0 %293
    %295 = vrot.lane.b32.xlu0 %v267, 64
    %v296 = vpop.permute.xlu0 %295
    %297 = vrot.lane.b32.xlu0 %v269, 64
    %v298 = vpop.permute.xlu0 %297
    %vm299 = vcmask 130048
    %v301 = vsel %vm299, %v263, 0
    %v304 = vsel %vm299, %v265, 0
    %v307 = vsel %vm299, %v267, 0
    %v310 = vsel %vm299, %v269, 0
    %v313 = vsel %vm299, %v292, 0
    %v316 = vsel %vm299, %v294, 0
    %v319 = vsel %vm299, %v296, 0
    %v322 = vsel %vm299, %v298, 0
    %324 = vmatprep.subr.bf16.mxu0 0
    %325 = vmatpush1.bf16.xpose.msra.mxu0 %v313
    %326 = vmatprep.subr.bf16.mxu0 0
    %327 = vmatpush1.bf16.xpose.msra.mxu0 %v316
    %328 = vmatprep.subr.bf16.mxu0 0
    %329 = vmatpush1.bf16.xpose.msra.mxu0 %v319
    %330 = vmatprep.subr.bf16.mxu0 0
    %331 = vmatpush1.bf16.xpose.msra.mxu0 %v322
    %332 = vmatprep.subr.bf16.mxu0 0
    %333 = vmatpush1.bf16.xpose.msra.mxu0 0
    %334 = vmatprep.subr.bf16.mxu0 0
    %335 = vmatpush1.bf16.xpose.msra.mxu0 0
    %336 = vmatprep.subr.bf16.mxu0 0
    %337 = vmatpush1.bf16.xpose.msra.mxu0 0
    %338 = vmatprep.subr.bf16.mxu0 0
    %339 = vmatpush1.bf16.xpose.msra.mxu0 0
    %340 = vmatprep.subr.bf16.mxu0 0
    %341 = vmatpush1.bf16.xpose.msra.mxu0 0
    %342 = vmatprep.subr.bf16.mxu0 0
    %343 = vmatpush1.bf16.xpose.msra.mxu0 0
    %344 = vmatprep.subr.bf16.mxu0 0
    %345 = vmatpush1.bf16.xpose.msra.mxu0 0
    %346 = vmatprep.subr.bf16.mxu0 0
    %347 = vmatpush1.bf16.xpose.msra.mxu0 0
    %348 = vmatprep.subr.bf16.mxu0 0
    %349 = vmatpush1.bf16.xpose.msra.mxu0 0
    %350 = vmatprep.subr.bf16.mxu0 0
    %351 = vmatpush1.bf16.xpose.msra.mxu0 0
    %352 = vmatprep.subr.bf16.mxu0 0
    %353 = vmatpush1.bf16.xpose.msra.mxu0 0
    %354 = vmatprep.subr.bf16.mxu0 0
    %355 = vmatpush1.bf16.xpose.msra.mxu0 0
    %356 = vmatprep.mubr.bf16.mxu0 0
    %357 = vmatmul.mubr.bf16.gmra.mrb[0].mxu0 %v301
    %v358 = vpop.f32.mrb[0].mxu0
    %v359 = vadd.f32 %v279, %v358
    %v360 = vpop.f32.mrb[0].mxu0
    %v361 = vpop.f32.mrb[0].mxu0
    %v362 = vadd.f32 %v280, %v361
    %v363 = vpop.f32.mrb[0].mxu0
    %364 = vmatprep.mubr.bf16.mxu0 0
    %365 = vmatmul.mubr.bf16.gmra.mrb[0].mxu0 %v304
    %v366 = vpop.f32.mrb[0].mxu0
    %v367 = vadd.f32 %v281, %v366
    %v368 = vpop.f32.mrb[0].mxu0
    %v369 = vpop.f32.mrb[0].mxu0
    %v370 = vadd.f32 %v282, %v369
    %v371 = vpop.f32.mrb[0].mxu0
    %372 = vmatprep.mubr.bf16.mxu0 0
    %373 = vmatmul.mubr.bf16.gmra.mrb[0].mxu0 %v307
    %v374 = vpop.f32.mrb[0].mxu0
    %v375 = vadd.f32 %v283, %v374
    %v376 = vpop.f32.mrb[0].mxu0
    %v377 = vpop.f32.mrb[0].mxu0
    %v378 = vadd.f32 %v284, %v377
    %v379 = vpop.f32.mrb[0].mxu0
    %380 = vmatprep.mubr.bf16.mxu0 0
    %381 = vmatmul.mubr.bf16.gmra.mrb[0].mxu0 %v310
    %v382 = vpop.f32.mrb[0].mxu0
    %v383 = vadd.f32 %v285, %v382
    %v384 = vpop.f32.mrb[0].mxu0
    %v385 = vpop.f32.mrb[0].mxu0
    %v386 = vadd.f32 %v286, %v385
    %v387 = vpop.f32.mrb[0].mxu0
    %388 = vdwg.mxu0
    %393 = vrot.lane.b32.xlu0 %v271, 64
    %v394 = vpop.permute.xlu0 %393
    %395 = vrot.lane.b32.xlu0 %v273, 64
    %v396 = vpop.permute.xlu0 %395
    %397 = vrot.lane.b32.xlu0 %v275, 64
    %v398 = vpop.permute.xlu0 %397
    %399 = vrot.lane.b32.xlu0 %v277, 64
    %v400 = vpop.permute.xlu0 %399
    %v402 = vsel %vm299, %v271, 0
    %v405 = vsel %vm299, %v273, 0
    %v408 = vsel %vm299, %v275, 0
    %v411 = vsel %vm299, %v277, 0
    %v414 = vsel %vm299, %v394, 0
    %v417 = vsel %vm299, %v396, 0
    %v420 = vsel %vm299, %v398, 0
    %v423 = vsel %vm299, %v400, 0
    %425 = vmatprep.subr.bf16.mxu0 0
    %426 = vmatpush1.bf16.xpose.msra.mxu0 %v414
    %427 = vmatprep.subr.bf16.mxu0 0
    %428 = vmatpush1.bf16.xpose.msra.mxu0 %v417
    %429 = vmatprep.subr.bf16.mxu0 0
    %430 = vmatpush1.bf16.xpose.msra.mxu0 %v420
    %431 = vmatprep.subr.bf16.mxu0 0
    %432 = vmatpush1.bf16.xpose.msra.mxu0 %v423
    %433 = vmatprep.subr.bf16.mxu0 0
    %434 = vmatpush1.bf16.xpose.msra.mxu0 0
    %435 = vmatprep.subr.bf16.mxu0 0
    %436 = vmatpush1.bf16.xpose.msra.mxu0 0
    %437 = vmatprep.subr.bf16.mxu0 0
    %438 = vmatpush1.bf16.xpose.msra.mxu0 0
    %439 = vmatprep.subr.bf16.mxu0 0
    %440 = vmatpush1.bf16.xpose.msra.mxu0 0
    %441 = vmatprep.subr.bf16.mxu0 0
    %442 = vmatpush1.bf16.xpose.msra.mxu0 0
    %443 = vmatprep.subr.bf16.mxu0 0
    %444 = vmatpush1.bf16.xpose.msra.mxu0 0
    %445 = vmatprep.subr.bf16.mxu0 0
    %446 = vmatpush1.bf16.xpose.msra.mxu0 0
    %447 = vmatprep.subr.bf16.mxu0 0
    %448 = vmatpush1.bf16.xpose.msra.mxu0 0
    %449 = vmatprep.subr.bf16.mxu0 0
    %450 = vmatpush1.bf16.xpose.msra.mxu0 0
    %451 = vmatprep.subr.bf16.mxu0 0
    %452 = vmatpush1.bf16.xpose.msra.mxu0 0
    %453 = vmatprep.subr.bf16.mxu0 0
    %454 = vmatpush1.bf16.xpose.msra.mxu0 0
    %455 = vmatprep.subr.bf16.mxu0 0
    %456 = vmatpush1.bf16.xpose.msra.mxu0 0
    %457 = vmatprep.mubr.bf16.mxu0 0
    %458 = vmatmul.mubr.bf16.gmra.mrb[0].mxu0 %v402
    %v459 = vpop.f32.mrb[0].mxu0
    %v460 = vadd.f32 %v279, %v459
    %v461 = vpop.f32.mrb[0].mxu0
    %v462 = vpop.f32.mrb[0].mxu0
    %v463 = vadd.f32 %v280, %v462
    %v464 = vpop.f32.mrb[0].mxu0
    %465 = vmatprep.mubr.bf16.mxu0 0
    %466 = vmatmul.mubr.bf16.gmra.mrb[0].mxu0 %v405
    %v467 = vpop.f32.mrb[0].mxu0
    %v468 = vadd.f32 %v281, %v467
    %v469 = vpop.f32.mrb[0].mxu0
    %v470 = vpop.f32.mrb[0].mxu0
    %v471 = vadd.f32 %v282, %v470
    %v472 = vpop.f32.mrb[0].mxu0
    %473 = vmatprep.mubr.bf16.mxu0 0
    %474 = vmatmul.mubr.bf16.gmra.mrb[0].mxu0 %v408
    %v475 = vpop.f32.mrb[0].mxu0
    %v476 = vadd.f32 %v283, %v475
    %v477 = vpop.f32.mrb[0].mxu0
    %v478 = vpop.f32.mrb[0].mxu0
    %v479 = vadd.f32 %v284, %v478
    %v480 = vpop.f32.mrb[0].mxu0
    %481 = vmatprep.mubr.bf16.mxu0 0
    %482 = vmatmul.mubr.bf16.gmra.mrb[0].mxu0 %v411
    %v483 = vpop.f32.mrb[0].mxu0
    %v484 = vadd.f32 %v285, %v483
    %v485 = vpop.f32.mrb[0].mxu0
    %v486 = vpop.f32.mrb[0].mxu0
    %v487 = vadd.f32 %v286, %v486
    %v488 = vpop.f32.mrb[0].mxu0
    %489 = vdwg.mxu0
    %vm490 = vcmask 523264
    %v491 = vsel %vm490, %v359, -inf
    %492 = vmax.xlane.f32.xlu0 %v491
    %v493 = vpop.xlane.xlu0 %492
    %v494 = vsel %vm490, %v362, -inf
    %495 = vmax.xlane.f32.xlu0 %v494
    %v496 = vpop.xlane.xlu0 %495
    %v497 = vsel %vm490, %v367, -inf
    %498 = vmax.xlane.f32.xlu0 %v497
    %v499 = vpop.xlane.xlu0 %498
    %v500 = vsel %vm490, %v370, -inf
    %501 = vmax.xlane.f32.xlu0 %v500
    %v502 = vpop.xlane.xlu0 %501
    %v503 = vsel %vm490, %v375, -inf
    %504 = vmax.xlane.f32.xlu0 %v503
    %v505 = vpop.xlane.xlu0 %504
    %v506 = vsel %vm490, %v378, -inf
    %507 = vmax.xlane.f32.xlu0 %v506
    %v508 = vpop.xlane.xlu0 %507
    %v509 = vsel %vm490, %v383, -inf
    %510 = vmax.xlane.f32.xlu0 %v509
    %v511 = vpop.xlane.xlu0 %510
    %v512 = vsel %vm490, %v386, -inf
    %513 = vmax.xlane.f32.xlu0 %v512
    %v514 = vpop.xlane.xlu0 %513
    %v515 = vsel %vm490, %v460, -inf
    %516 = vmax.xlane.f32.xlu0 %v515
    %v517 = vpop.xlane.xlu0 %516
    %v518 = vsel %vm490, %v463, -inf
    %519 = vmax.xlane.f32.xlu0 %v518
    %v520 = vpop.xlane.xlu0 %519
    %v521 = vsel %vm490, %v468, -inf
    %522 = vmax.xlane.f32.xlu0 %v521
    %v523 = vpop.xlane.xlu0 %522
    %v524 = vsel %vm490, %v471, -inf
    %525 = vmax.xlane.f32.xlu0 %v524
    %v526 = vpop.xlane.xlu0 %525
    %v527 = vsel %vm490, %v476, -inf
    %528 = vmax.xlane.f32.xlu0 %v527
    %v529 = vpop.xlane.xlu0 %528
    %v530 = vsel %vm490, %v479, -inf
    %531 = vmax.xlane.f32.xlu0 %v530
    %v532 = vpop.xlane.xlu0 %531
    %v533 = vsel %vm490, %v484, -inf
    %534 = vmax.xlane.f32.xlu0 %v533
    %v535 = vpop.xlane.xlu0 %534
    %v536 = vsel %vm490, %v487, -inf
    %537 = vmax.xlane.f32.xlu0 %v536
    %v538 = vpop.xlane.xlu0 %537
    %v539 = vsub.f32 %v359, %v493
    %v540 = vsub.f32 %v362, %v496
    %v541 = vsub.f32 %v367, %v499
    %v542 = vsub.f32 %v370, %v502
    %v543 = vsub.f32 %v375, %v505
    %v544 = vsub.f32 %v378, %v508
    %v545 = vsub.f32 %v383, %v511
    %v546 = vsub.f32 %v386, %v514
    %v547 = vsub.f32 %v460, %v517
    %v548 = vsub.f32 %v463, %v520
    %v549 = vsub.f32 %v468, %v523
    %v550 = vsub.f32 %v471, %v526
    %v551 = vsub.f32 %v476, %v529
    %v552 = vsub.f32 %v479, %v532
    %v553 = vsub.f32 %v484, %v535
    %v554 = vsub.f32 %v487, %v538
    %v555 = vmul.f32 %v539, 1.442695
    %v556 = vpow.pop %v555
    %v557 = vmul.f32 %v540, 1.442695
    %v558 = vpow.pop %v557
    %v559 = vmul.f32 %v541, 1.442695
    %v560 = vpow.pop %v559
    %v561 = vmul.f32 %v542, 1.442695
    %v562 = vpow.pop %v561
    %v563 = vmul.f32 %v543, 1.442695
    %v564 = vpow.pop %v563
    %v565 = vmul.f32 %v544, 1.442695
    %v566 = vpow.pop %v565
    %v567 = vmul.f32 %v545, 1.442695
    %v568 = vpow.pop %v567
    %v569 = vmul.f32 %v546, 1.442695
    %v570 = vpow.pop %v569
    %v571 = vmul.f32 %v547, 1.442695
    %v572 = vpow.pop %v571
    %v573 = vmul.f32 %v548, 1.442695
    %v574 = vpow.pop %v573
    %v575 = vmul.f32 %v549, 1.442695
    %v576 = vpow.pop %v575
    %v577 = vmul.f32 %v550, 1.442695
    %v578 = vpow.pop %v577
    %v579 = vmul.f32 %v551, 1.442695
    %v580 = vpow.pop %v579
    %v581 = vmul.f32 %v552, 1.442695
    %v582 = vpow.pop %v581
    %v583 = vmul.f32 %v553, 1.442695
    %v584 = vpow.pop %v583
    %v585 = vmul.f32 %v554, 1.442695
    %v586 = vpow.pop %v585
    %v587 = vsel %vm490, %v556, 0.0
    %588 = vadd.xlane.f32.xlu0 %v587
    %v589 = vpop.xlane.xlu0 %588
    %v590 = vsel %vm490, %v558, 0.0
    %591 = vadd.xlane.f32.xlu0 %v590
    %v592 = vpop.xlane.xlu0 %591
    %v593 = vsel %vm490, %v560, 0.0
    %594 = vadd.xlane.f32.xlu0 %v593
    %v595 = vpop.xlane.xlu0 %594
    %v596 = vsel %vm490, %v562, 0.0
    %597 = vadd.xlane.f32.xlu0 %v596
    %v598 = vpop.xlane.xlu0 %597
    %v599 = vsel %vm490, %v564, 0.0
    %600 = vadd.xlane.f32.xlu0 %v599
    %v601 = vpop.xlane.xlu0 %600
    %v602 = vsel %vm490, %v566, 0.0
    %603 = vadd.xlane.f32.xlu0 %v602
    %v604 = vpop.xlane.xlu0 %603
    %v605 = vsel %vm490, %v568, 0.0
    %606 = vadd.xlane.f32.xlu0 %v605
    %v607 = vpop.xlane.xlu0 %606
    %v608 = vsel %vm490, %v570, 0.0
    %609 = vadd.xlane.f32.xlu0 %v608
    %v610 = vpop.xlane.xlu0 %609
    %v611 = vsel %vm490, %v572, 0.0
    %612 = vadd.xlane.f32.xlu0 %v611
    %v613 = vpop.xlane.xlu0 %612
    %v614 = vsel %vm490, %v574, 0.0
    %615 = vadd.xlane.f32.xlu0 %v614
    %v616 = vpop.xlane.xlu0 %615
    %v617 = vsel %vm490, %v576, 0.0
    %618 = vadd.xlane.f32.xlu0 %v617
    %v619 = vpop.xlane.xlu0 %618
    %v620 = vsel %vm490, %v578, 0.0
    %621 = vadd.xlane.f32.xlu0 %v620
    %v622 = vpop.xlane.xlu0 %621
    %v623 = vsel %vm490, %v580, 0.0
    %624 = vadd.xlane.f32.xlu0 %v623
    %v625 = vpop.xlane.xlu0 %624
    %v626 = vsel %vm490, %v582, 0.0
    %627 = vadd.xlane.f32.xlu0 %v626
    %v628 = vpop.xlane.xlu0 %627
    %v629 = vsel %vm490, %v584, 0.0
    %630 = vadd.xlane.f32.xlu0 %v629
    %v631 = vpop.xlane.xlu0 %630
    %v632 = vsel %vm490, %v586, 0.0
    %633 = vadd.xlane.f32.xlu0 %v632
    %v634 = vpop.xlane.xlu0 %633
    %v635 = vrcp.pop %v589
    %v636 = vrcp.pop %v592
    %v637 = vrcp.pop %v595
    %v638 = vrcp.pop %v598
    %v639 = vrcp.pop %v601
    %v640 = vrcp.pop %v604
    %v641 = vrcp.pop %v607
    %v642 = vrcp.pop %v610
    %v643 = vrcp.pop %v613
    %v644 = vrcp.pop %v616
    %v645 = vrcp.pop %v619
    %v646 = vrcp.pop %v622
    %v647 = vrcp.pop %v625
    %v648 = vrcp.pop %v628
    %v649 = vrcp.pop %v631
    %v650 = vrcp.pop %v634
    %v651 = vmul.f32 %v556, %v635
    %v652 = vmul.f32 %v558, %v636
    %v653 = vmul.f32 %v560, %v637
    %v654 = vmul.f32 %v562, %v638
    %v655 = vmul.f32 %v564, %v639
    %v656 = vmul.f32 %v566, %v640
    %v657 = vmul.f32 %v568, %v641
    %v658 = vmul.f32 %v570, %v642
    %v659 = vmul.f32 %v572, %v643
    %v660 = vmul.f32 %v574, %v644
    %v661 = vmul.f32 %v576, %v645
    %v662 = vmul.f32 %v578, %v646
    %v663 = vmul.f32 %v580, %v647
    %v664 = vmul.f32 %v582, %v648
    %v665 = vmul.f32 %v584, %v649
    %v666 = vmul.f32 %v586, %v650
    %v667 = vpack.c.bf16 %v652, %v651
    %v668 = vpack.c.bf16 %v654, %v653
    %v669 = vpack.c.bf16 %v656, %v655
    %v670 = vpack.c.bf16 %v658, %v657
    %v671 = vpack.c.bf16 %v660, %v659
    %v672 = vpack.c.bf16 %v662, %v661
    %v673 = vpack.c.bf16 %v664, %v663
    %v674 = vpack.c.bf16 %v666, %v665
    %v676 = vsel %vm490, %v667, 0
    %v679 = vsel %vm490, %v668, 0
    %v682 = vsel %vm490, %v669, 0
    %v685 = vsel %vm490, %v670, 0
    %687 = vmatprep.subr.bf16.mxu0 0
    %688 = vmatpush1.bf16.msra.mxu0 %v264
    %689 = vmatprep.subr.bf16.mxu0 0
    %690 = vmatpush1.bf16.msra.mxu0 %v266
    %691 = vmatprep.subr.bf16.mxu0 0
    %692 = vmatpush1.bf16.msra.mxu0 %v268
    %693 = vmatprep.subr.bf16.mxu0 0
    %694 = vmatpush1.bf16.msra.mxu0 %v270
    %695 = vmatprep.subr.bf16.mxu0 0
    %696 = vmatpush1.bf16.msra.mxu0 0
    %697 = vmatprep.subr.bf16.mxu0 0
    %698 = vmatpush1.bf16.msra.mxu0 0
    %699 = vmatprep.subr.bf16.mxu0 0
    %700 = vmatpush1.bf16.msra.mxu0 0
    %701 = vmatprep.subr.bf16.mxu0 0
    %702 = vmatpush1.bf16.msra.mxu0 0
    %703 = vmatprep.subr.bf16.mxu0 0
    %704 = vmatpush1.bf16.msra.mxu0 0
    %705 = vmatprep.subr.bf16.mxu0 0
    %706 = vmatpush1.bf16.msra.mxu0 0
    %707 = vmatprep.subr.bf16.mxu0 0
    %708 = vmatpush1.bf16.msra.mxu0 0
    %709 = vmatprep.subr.bf16.mxu0 0
    %710 = vmatpush1.bf16.msra.mxu0 0
    %711 = vmatprep.subr.bf16.mxu0 0
    %712 = vmatpush1.bf16.msra.mxu0 0
    %713 = vmatprep.subr.bf16.mxu0 0
    %714 = vmatpush1.bf16.msra.mxu0 0
    %715 = vmatprep.subr.bf16.mxu0 0
    %716 = vmatpush1.bf16.msra.mxu0 0
    %717 = vmatprep.subr.bf16.mxu0 0
    %718 = vmatpush1.bf16.msra.mxu0 0
    %719 = vmatprep.mubr.bf16.mxu0 0
    %720 = vmatmul.mubr.bf16.gmra.mrb[0].mxu0 %v676
    %v721 = vpop.f32.mrb[0].mxu0
    %v722 = vadd.f32 0.0, %v721
    %v723 = vpop.f32.mrb[0].mxu0
    %v724 = vpop.f32.mrb[0].mxu0
    %v725 = vadd.f32 0.0, %v724
    %v726 = vpop.f32.mrb[0].mxu0
    %727 = vmatprep.mubr.bf16.mxu0 0
    %728 = vmatmul.mubr.bf16.gmra.mrb[0].mxu0 %v679
    %v729 = vpop.f32.mrb[0].mxu0
    %v730 = vadd.f32 0.0, %v729
    %v731 = vpop.f32.mrb[0].mxu0
    %v732 = vpop.f32.mrb[0].mxu0
    %v733 = vadd.f32 0.0, %v732
    %v734 = vpop.f32.mrb[0].mxu0
    %735 = vmatprep.mubr.bf16.mxu0 0
    %736 = vmatmul.mubr.bf16.gmra.mrb[0].mxu0 %v682
    %v737 = vpop.f32.mrb[0].mxu0
    %v738 = vadd.f32 0.0, %v737
    %v739 = vpop.f32.mrb[0].mxu0
    %v740 = vpop.f32.mrb[0].mxu0
    %v741 = vadd.f32 0.0, %v740
    %v742 = vpop.f32.mrb[0].mxu0
    %743 = vmatprep.mubr.bf16.mxu0 0
    %744 = vmatmul.mubr.bf16.gmra.mrb[0].mxu0 %v685
    %v745 = vpop.f32.mrb[0].mxu0
    %v746 = vadd.f32 0.0, %v745
    %v747 = vpop.f32.mrb[0].mxu0
    %v748 = vpop.f32.mrb[0].mxu0
    %v749 = vadd.f32 0.0, %v748
    %v750 = vpop.f32.mrb[0].mxu0
    %751 = vdwg.mxu0
    %v753 = vsel %vm490, %v671, 0
    %v756 = vsel %vm490, %v672, 0
    %v759 = vsel %vm490, %v673, 0
    %v762 = vsel %vm490, %v674, 0
    %764 = vmatprep.subr.bf16.mxu0 0
    %765 = vmatpush1.bf16.msra.mxu0 %v272
    %766 = vmatprep.subr.bf16.mxu0 0
    %767 = vmatpush1.bf16.msra.mxu0 %v274
    %768 = vmatprep.subr.bf16.mxu0 0
    %769 = vmatpush1.bf16.msra.mxu0 %v276
    %770 = vmatprep.subr.bf16.mxu0 0
    %771 = vmatpush1.bf16.msra.mxu0 %v278
    %772 = vmatprep.subr.bf16.mxu0 0
    %773 = vmatpush1.bf16.msra.mxu0 0
    %774 = vmatprep.subr.bf16.mxu0 0
    %775 = vmatpush1.bf16.msra.mxu0 0
    %776 = vmatprep.subr.bf16.mxu0 0
    %777 = vmatpush1.bf16.msra.mxu0 0
    %778 = vmatprep.subr.bf16.mxu0 0
    %779 = vmatpush1.bf16.msra.mxu0 0
    %780 = vmatprep.subr.bf16.mxu0 0
    %781 = vmatpush1.bf16.msra.mxu0 0
    %782 = vmatprep.subr.bf16.mxu0 0
    %783 = vmatpush1.bf16.msra.mxu0 0
    %784 = vmatprep.subr.bf16.mxu0 0
    %785 = vmatpush1.bf16.msra.mxu0 0
    %786 = vmatprep.subr.bf16.mxu0 0
    %787 = vmatpush1.bf16.msra.mxu0 0
    %788 = vmatprep.subr.bf16.mxu0 0
    %789 = vmatpush1.bf16.msra.mxu0 0
    %790 = vmatprep.subr.bf16.mxu0 0
    %791 = vmatpush1.bf16.msra.mxu0 0
    %792 = vmatprep.subr.bf16.mxu0 0
    %793 = vmatpush1.bf16.msra.mxu0 0
    %794 = vmatprep.subr.bf16.mxu0 0
    %795 = vmatpush1.bf16.msra.mxu0 0
    %796 = vmatprep.mubr.bf16.mxu0 0
    %797 = vmatmul.mubr.bf16.gmra.mrb[0].mxu0 %v753
    %v798 = vpop.f32.mrb[0].mxu0
    %v799 = vadd.f32 0.0, %v798
    %v800 = vpop.f32.mrb[0].mxu0
    %v801 = vpop.f32.mrb[0].mxu0
    %v802 = vadd.f32 0.0, %v801
    %v803 = vpop.f32.mrb[0].mxu0
    %804 = vmatprep.mubr.bf16.mxu0 0
    %805 = vmatmul.mubr.bf16.gmra.mrb[0].mxu0 %v756
    %v806 = vpop.f32.mrb[0].mxu0
    %v807 = vadd.f32 0.0, %v806
    %v808 = vpop.f32.mrb[0].mxu0
    %v809 = vpop.f32.mrb[0].mxu0
    %v810 = vadd.f32 0.0, %v809
    %v811 = vpop.f32.mrb[0].mxu0
    %812 = vmatprep.mubr.bf16.mxu0 0
    %813 = vmatmul.mubr.bf16.gmra.mrb[0].mxu0 %v759
    %v814 = vpop.f32.mrb[0].mxu0
    %v815 = vadd.f32 0.0, %v814
    %v816 = vpop.f32.mrb[0].mxu0
    %v817 = vpop.f32.mrb[0].mxu0
    %v818 = vadd.f32 0.0, %v817
    %v819 = vpop.f32.mrb[0].mxu0
    %820 = vmatprep.mubr.bf16.mxu0 0
    %821 = vmatmul.mubr.bf16.gmra.mrb[0].mxu0 %v762
    %v822 = vpop.f32.mrb[0].mxu0
    %v823 = vadd.f32 0.0, %v822
    %v824 = vpop.f32.mrb[0].mxu0
    %v825 = vpop.f32.mrb[0].mxu0
    %v826 = vadd.f32 0.0, %v825
    %v827 = vpop.f32.mrb[0].mxu0
    %828 = vdwg.mxu0
    %s829 = scalar_lea.vmem [#allocation2], 64
    %v830 = vld [vmem:[%s829] sm:$0xff]
    %v831 = vld [vmem:[%s829 + $0x8] sm:$0xff]
    %v832 = vld [vmem:[%s829 + $0x10] sm:$0xff]
    %v833 = vld [vmem:[%s829 + $0x18] sm:$0xff]
    %v834 = vld [vmem:[%s829 + $0x20] sm:$0xff]
    %v835 = vld [vmem:[%s829 + $0x28] sm:$0xff]
    %v836 = vld [vmem:[%s829 + $0x30] sm:$0xff]
    %v837 = vld [vmem:[%s829 + $0x38] sm:$0xff]
    %838 = vrot.lane.b32.xlu0 %v263, 112
    %v839 = vpop.permute.xlu0 %838
    %840 = vrot.lane.b32.xlu0 %v265, 112
    %v841 = vpop.permute.xlu0 %840
    %842 = vrot.lane.b32.xlu0 %v267, 112
    %v843 = vpop.permute.xlu0 %842
    %844 = vrot.lane.b32.xlu0 %v269, 112
    %v845 = vpop.permute.xlu0 %844
    %846 = vrot.lane.b32.xlu0 %v263, 48
    %v847 = vpop.permute.xlu0 %846
    %848 = vrot.lane.b32.xlu0 %v265, 48
    %v849 = vpop.permute.xlu0 %848
    %850 = vrot.lane.b32.xlu0 %v267, 48
    %v851 = vpop.permute.xlu0 %850
    %852 = vrot.lane.b32.xlu0 %v269, 48
    %v853 = vpop.permute.xlu0 %852
    %v855 = vsel %vm299, %v839, 0
    %v858 = vsel %vm299, %v841, 0
    %v861 = vsel %vm299, %v843, 0
    %v864 = vsel %vm299, %v845, 0
    %v867 = vsel %vm299, %v847, 0
    %v870 = vsel %vm299, %v849, 0
    %v873 = vsel %vm299, %v851, 0
    %v876 = vsel %vm299, %v853, 0
    %878 = vmatprep.subr.bf16.mxu0 0
    %879 = vmatpush1.bf16.xpose.msra.mxu0 %v867
    %880 = vmatprep.subr.bf16.mxu0 0
    %881 = vmatpush1.bf16.xpose.msra.mxu0 %v870
    %882 = vmatprep.subr.bf16.mxu0 0
    %883 = vmatpush1.bf16.xpose.msra.mxu0 %v873
    %884 = vmatprep.subr.bf16.mxu0 0
    %885 = vmatpush1.bf16.xpose.msra.mxu0 %v876
    %886 = vmatprep.subr.bf16.mxu0 0
    %887 = vmatpush1.bf16.xpose.msra.mxu0 0
    %888 = vmatprep.subr.bf16.mxu0 0
    %889 = vmatpush1.bf16.xpose.msra.mxu0 0
    %890 = vmatprep.subr.bf16.mxu0 0
    %891 = vmatpush1.bf16.xpose.msra.mxu0 0
    %892 = vmatprep.subr.bf16.mxu0 0
    %893 = vmatpush1.bf16.xpose.msra.mxu0 0
    %894 = vmatprep.subr.bf16.mxu0 0
    %895 = vmatpush1.bf16.xpose.msra.mxu0 0
    %896 = vmatprep.subr.bf16.mxu0 0
    %897 = vmatpush1.bf16.xpose.msra.mxu0 0
    %898 = vmatprep.subr.bf16.mxu0 0
    %899 = vmatpush1.bf16.xpose.msra.mxu0 0
    %900 = vmatprep.subr.bf16.mxu0 0
    %901 = vmatpush1.bf16.xpose.msra.mxu0 0
    %902 = vmatprep.subr.bf16.mxu0 0
    %903 = vmatpush1.bf16.xpose.msra.mxu0 0
    %904 = vmatprep.subr.bf16.mxu0 0
    %905 = vmatpush1.bf16.xpose.msra.mxu0 0
    %906 = vmatprep.subr.bf16.mxu0 0
    %907 = vmatpush1.bf16.xpose.msra.mxu0 0
    %908 = vmatprep.subr.bf16.mxu0 0
    %909 = vmatpush1.bf16.xpose.msra.mxu0 0
    %910 = vmatprep.mubr.bf16.mxu0 0
    %911 = vmatmul.mubr.bf16.gmra.mrb[0].mxu0 %v855
    %v912 = vpop.f32.mrb[0].mxu0
    %v913 = vadd.f32 %v830, %v912
    %v914 = vpop.f32.mrb[0].mxu0
    %v915 = vpop.f32.mrb[0].mxu0
    %v916 = vadd.f32 %v831, %v915
    %v917 = vpop.f32.mrb[0].mxu0
    %918 = vmatprep.mubr.bf16.mxu0 0
    %919 = vmatmul.mubr.bf16.gmra.mrb[0].mxu0 %v858
    %v920 = vpop.f32.mrb[0].mxu0
    %v921 = vadd.f32 %v832, %v920
    %v922 = vpop.f32.mrb[0].mxu0
    %v923 = vpop.f32.mrb[0].mxu0
    %v924 = vadd.f32 %v833, %v923
    %v925 = vpop.f32.mrb[0].mxu0
    %926 = vmatprep.mubr.bf16.mxu0 0
    %927 = vmatmul.mubr.bf16.gmra.mrb[0].mxu0 %v861
    %v928 = vpop.f32.mrb[0].mxu0
    %v929 = vadd.f32 %v834, %v928
    %v930 = vpop.f32.mrb[0].mxu0
    %v931 = vpop.f32.mrb[0].mxu0
    %v932 = vadd.f32 %v835, %v931
    %v933 = vpop.f32.mrb[0].mxu0
    %934 = vmatprep.mubr.bf16.mxu0 0
    %935 = vmatmul.mubr.bf16.gmra.mrb[0].mxu0 %v864
    %v936 = vpop.f32.mrb[0].mxu0
    %v937 = vadd.f32 %v836, %v936
    %v938 = vpop.f32.mrb[0].mxu0
    %v939 = vpop.f32.mrb[0].mxu0
    %v940 = vadd.f32 %v837, %v939
    %v941 = vpop.f32.mrb[0].mxu0
    %942 = vdwg.mxu0
    %943 = vrot.lane.b32.xlu0 %v271, 112
    %v944 = vpop.permute.xlu0 %943
    %945 = vrot.lane.b32.xlu0 %v273, 112
    %v946 = vpop.permute.xlu0 %945
    %947 = vrot.lane.b32.xlu0 %v275, 112
    %v948 = vpop.permute.xlu0 %947
    %949 = vrot.lane.b32.xlu0 %v277, 112
    %v950 = vpop.permute.xlu0 %949
    %951 = vrot.lane.b32.xlu0 %v271, 48
    %v952 = vpop.permute.xlu0 %951
    %953 = vrot.lane.b32.xlu0 %v273, 48
    %v954 = vpop.permute.xlu0 %953
    %955 = vrot.lane.b32.xlu0 %v275, 48
    %v956 = vpop.permute.xlu0 %955
    %957 = vrot.lane.b32.xlu0 %v277, 48
    %v958 = vpop.permute.xlu0 %957
    %v960 = vsel %vm299, %v944, 0
    %v963 = vsel %vm299, %v946, 0
    %v966 = vsel %vm299, %v948, 0
    %v969 = vsel %vm299, %v950, 0
    %v972 = vsel %vm299, %v952, 0
    %v975 = vsel %vm299, %v954, 0
    %v978 = vsel %vm299, %v956, 0
    %v981 = vsel %vm299, %v958, 0
    %983 = vmatprep.subr.bf16.mxu0 0
    %984 = vmatpush1.bf16.xpose.msra.mxu0 %v972
    %985 = vmatprep.subr.bf16.mxu0 0
    %986 = vmatpush1.bf16.xpose.msra.mxu0 %v975
    %987 = vmatprep.subr.bf16.mxu0 0
    %988 = vmatpush1.bf16.xpose.msra.mxu0 %v978
    %989 = vmatprep.subr.bf16.mxu0 0
    %990 = vmatpush1.bf16.xpose.msra.mxu0 %v981
    %991 = vmatprep.subr.bf16.mxu0 0
    %992 = vmatpush1.bf16.xpose.msra.mxu0 0
    %993 = vmatprep.subr.bf16.mxu0 0
    %994 = vmatpush1.bf16.xpose.msra.mxu0 0
    %995 = vmatprep.subr.bf16.mxu0 0
    %996 = vmatpush1.bf16.xpose.msra.mxu0 0
    %997 = vmatprep.subr.bf16.mxu0 0
    %998 = vmatpush1.bf16.xpose.msra.mxu0 0
    %999 = vmatprep.subr.bf16.mxu0 0
    %1000 = vmatpush1.bf16.xpose.msra.mxu0 0
    %1001 = vmatprep.subr.bf16.mxu0 0
    %1002 = vmatpush1.bf16.xpose.msra.mxu0 0
    %1003 = vmatprep.subr.bf16.mxu0 0
    %1004 = vmatpush1.bf16.xpose.msra.mxu0 0
    %1005 = vmatprep.subr.bf16.mxu0 0
    %1006 = vmatpush1.bf16.xpose.msra.mxu0 0
    %1007 = vmatprep.subr.bf16.mxu0 0
    %1008 = vmatpush1.bf16.xpose.msra.mxu0 0
    %1009 = vmatprep.subr.bf16.mxu0 0
    %1010 = vmatpush1.bf16.xpose.msra.mxu0 0
    %1011 = vmatprep.subr.bf16.mxu0 0
    %1012 = vmatpush1.bf16.xpose.msra.mxu0 0
    %1013 = vmatprep.subr.bf16.mxu0 0
    %1014 = vmatpush1.bf16.xpose.msra.mxu0 0
    %1015 = vmatprep.mubr.bf16.mxu0 0
    %1016 = vmatmul.mubr.bf16.gmra.mrb[0].mxu0 %v960
    %v1017 = vpop.f32.mrb[0].mxu0
    %v1018 = vadd.f32 %v830, %v1017
    %v1019 = vpop.f32.mrb[0].mxu0
    %v1020 = vpop.f32.mrb[0].mxu0
    %v1021 = vadd.f32 %v831, %v1020
    %v1022 = vpop.f32.mrb[0].mxu0
    %1023 = vmatprep.mubr.bf16.mxu0 0
    %1024 = vmatmul.mubr.bf16.gmra.mrb[0].mxu0 %v963
    %v1025 = vpop.f32.mrb[0].mxu0
    %v1026 = vadd.f32 %v832, %v1025
    %v1027 = vpop.f32.mrb[0].mxu0
    %v1028 = vpop.f32.mrb[0].mxu0
    %v1029 = vadd.f32 %v833, %v1028
    %v1030 = vpop.f32.mrb[0].mxu0
    %1031 = vmatprep.mubr.bf16.mxu0 0
    %1032 = vmatmul.mubr.bf16.gmra.mrb[0].mxu0 %v966
    %v1033 = vpop.f32.mrb[0].mxu0
    %v1034 = vadd.f32 %v834, %v1033
    %v1035 = vpop.f32.mrb[0].mxu0
    %v1036 = vpop.f32.mrb[0].mxu0
    %v1037 = vadd.f32 %v835, %v1036
    %v1038 = vpop.f32.mrb[0].mxu0
    %1039 = vmatprep.mubr.bf16.mxu0 0
    %1040 = vmatmul.mubr.bf16.gmra.mrb[0].mxu0 %v969
    %v1041 = vpop.f32.mrb[0].mxu0
    %v1042 = vadd.f32 %v836, %v1041
    %v1043 = vpop.f32.mrb[0].mxu0
    %v1044 = vpop.f32.mrb[0].mxu0
    %v1045 = vadd.f32 %v837, %v1044
    %v1046 = vpop.f32.mrb[0].mxu0
    %1047 = vdwg.mxu0
    %v1048 = vsel %vm490, %v913, -inf
    %1049 = vmax.xlane.f32.xlu0 %v1048
    %v1050 = vpop.xlane.xlu0 %1049
    %v1051 = vsel %vm490, %v916, -inf
    %1052 = vmax.xlane.f32.xlu0 %v1051
    %v1053 = vpop.xlane.xlu0 %1052
    %v1054 = vsel %vm490, %v921, -inf
    %1055 = vmax.xlane.f32.xlu0 %v1054
    %v1056 = vpop.xlane.xlu0 %1055
    %v1057 = vsel %vm490, %v924, -inf
    %1058 = vmax.xlane.f32.xlu0 %v1057
    %v1059 = vpop.xlane.xlu0 %1058
    %v1060 = vsel %vm490, %v929, -inf
    %1061 = vmax.xlane.f32.xlu0 %v1060
    %v1062 = vpop.xlane.xlu0 %1061
    %v1063 = vsel %vm490, %v932, -inf
    %1064 = vmax.xlane.f32.xlu0 %v1063
    %v1065 = vpop.xlane.xlu0 %1064
    %v1066 = vsel %vm490, %v937, -inf
    %1067 = vmax.xlane.f32.xlu0 %v1066
    %v1068 = vpop.xlane.xlu0 %1067
    %v1069 = vsel %vm490, %v940, -inf
    %1070 = vmax.xlane.f32.xlu0 %v1069
    %v1071 = vpop.xlane.xlu0 %1070
    %v1072 = vsel %vm490, %v1018, -inf
    %1073 = vmax.xlane.f32.xlu0 %v1072
    %v1074 = vpop.xlane.xlu0 %1073
    %v1075 = vsel %vm490, %v1021, -inf
    %1076 = vmax.xlane.f32.xlu0 %v1075
    %v1077 = vpop.xlane.xlu0 %1076
    %v1078 = vsel %vm490, %v1026, -inf
    %1079 = vmax.xlane.f32.xlu0 %v1078
    %v1080 = vpop.xlane.xlu0 %1079
    %v1081 = vsel %vm490, %v1029, -inf
    %1082 = vmax.xlane.f32.xlu0 %v1081
    %v1083 = vpop.xlane.xlu0 %1082
    %v1084 = vsel %vm490, %v1034, -inf
    %1085 = vmax.xlane.f32.xlu0 %v1084
    %v1086 = vpop.xlane.xlu0 %1085
    %v1087 = vsel %vm490, %v1037, -inf
    %1088 = vmax.xlane.f32.xlu0 %v1087
    %v1089 = vpop.xlane.xlu0 %1088
    %v1090 = vsel %vm490, %v1042, -inf
    %1091 = vmax.xlane.f32.xlu0 %v1090
    %v1092 = vpop.xlane.xlu0 %1091
    %v1093 = vsel %vm490, %v1045, -inf
    %1094 = vmax.xlane.f32.xlu0 %v1093
    %v1095 = vpop.xlane.xlu0 %1094
    %v1096 = vsub.f32 %v913, %v1050
    %v1097 = vsub.f32 %v916, %v1053
    %v1098 = vsub.f32 %v921, %v1056
    %v1099 = vsub.f32 %v924, %v1059
    %v1100 = vsub.f32 %v929, %v1062
    %v1101 = vsub.f32 %v932, %v1065
    %v1102 = vsub.f32 %v937, %v1068
    %v1103 = vsub.f32 %v940, %v1071
    %v1104 = vsub.f32 %v1018, %v1074
    %v1105 = vsub.f32 %v1021, %v1077
    %v1106 = vsub.f32 %v1026, %v1080
    %v1107 = vsub.f32 %v1029, %v1083
    %v1108 = vsub.f32 %v1034, %v1086
    %v1109 = vsub.f32 %v1037, %v1089
    %v1110 = vsub.f32 %v1042, %v1092
    %v1111 = vsub.f32 %v1045, %v1095
    %v1112 = vmul.f32 %v1096, 1.442695
    %v1113 = vpow.pop %v1112
    %v1114 = vmul.f32 %v1097, 1.442695
    %v1115 = vpow.pop %v1114
    %v1116 = vmul.f32 %v1098, 1.442695
    %v1117 = vpow.pop %v1116
    %v1118 = vmul.f32 %v1099, 1.442695
    %v1119 = vpow.pop %v1118
    %v1120 = vmul.f32 %v1100, 1.442695
    %v1121 = vpow.pop %v1120
    %v1122 = vmul.f32 %v1101, 1.442695
    %v1123 = vpow.pop %v1122
    %v1124 = vmul.f32 %v1102, 1.442695
    %v1125 = vpow.pop %v1124
    %v1126 = vmul.f32 %v1103, 1.442695
    %v1127 = vpow.pop %v1126
    %v1128 = vmul.f32 %v1104, 1.442695
    %v1129 = vpow.pop %v1128
    %v1130 = vmul.f32 %v1105, 1.442695
    %v1131 = vpow.pop %v1130
    %v1132 = vmul.f32 %v1106, 1.442695
    %v1133 = vpow.pop %v1132
    %v1134 = vmul.f32 %v1107, 1.442695
    %v1135 = vpow.pop %v1134
    %v1136 = vmul.f32 %v1108, 1.442695
    %v1137 = vpow.pop %v1136
    %v1138 = vmul.f32 %v1109, 1.442695
    %v1139 = vpow.pop %v1138
    %v1140 = vmul.f32 %v1110, 1.442695
    %v1141 = vpow.pop %v1140
    %v1142 = vmul.f32 %v1111, 1.442695
    %v1143 = vpow.pop %v1142
    %v1144 = vsel %vm490, %v1113, 0.0
    %1145 = vadd.xlane.f32.xlu0 %v1144
    %v1146 = vpop.xlane.xlu0 %1145
    %v1147 = vsel %vm490, %v1115, 0.0
    %1148 = vadd.xlane.f32.xlu0 %v1147
    %v1149 = vpop.xlane.xlu0 %1148
    %v1150 = vsel %vm490, %v1117, 0.0
    %1151 = vadd.xlane.f32.xlu0 %v1150
    %v1152 = vpop.xlane.xlu0 %1151
    %v1153 = vsel %vm490, %v1119, 0.0
    %1154 = vadd.xlane.f32.xlu0 %v1153
    %v1155 = vpop.xlane.xlu0 %1154
    %v1156 = vsel %vm490, %v1121, 0.0
    %1157 = vadd.xlane.f32.xlu0 %v1156
    %v1158 = vpop.xlane.xlu0 %1157
    %v1159 = vsel %vm490, %v1123, 0.0
    %1160 = vadd.xlane.f32.xlu0 %v1159
    %v1161 = vpop.xlane.xlu0 %1160
    %v1162 = vsel %vm490, %v1125, 0.0
    %1163 = vadd.xlane.f32.xlu0 %v1162
    %v1164 = vpop.xlane.xlu0 %1163
    %v1165 = vsel %vm490, %v1127, 0.0
    %1166 = vadd.xlane.f32.xlu0 %v1165
    %v1167 = vpop.xlane.xlu0 %1166
    %v1168 = vsel %vm490, %v1129, 0.0
    %1169 = vadd.xlane.f32.xlu0 %v1168
    %v1170 = vpop.xlane.xlu0 %1169
    %v1171 = vsel %vm490, %v1131, 0.0
    %1172 = vadd.xlane.f32.xlu0 %v1171
    %v1173 = vpop.xlane.xlu0 %1172
    %v1174 = vsel %vm490, %v1133, 0.0
    %1175 = vadd.xlane.f32.xlu0 %v1174
    %v1176 = vpop.xlane.xlu0 %1175
    %v1177 = vsel %vm490, %v1135, 0.0
    %1178 = vadd.xlane.f32.xlu0 %v1177
    %v1179 = vpop.xlane.xlu0 %1178
    %v1180 = vsel %vm490, %v1137, 0.0
    %1181 = vadd.xlane.f32.xlu0 %v1180
    %v1182 = vpop.xlane.xlu0 %1181
    %v1183 = vsel %vm490, %v1139, 0.0
    %1184 = vadd.xlane.f32.xlu0 %v1183
    %v1185 = vpop.xlane.xlu0 %1184
    %v1186 = vsel %vm490, %v1141, 0.0
    %1187 = vadd.xlane.f32.xlu0 %v1186
    %v1188 = vpop.xlane.xlu0 %1187
    %v1189 = vsel %vm490, %v1143, 0.0
    %1190 = vadd.xlane.f32.xlu0 %v1189
    %v1191 = vpop.xlane.xlu0 %1190
    %v1192 = vrcp.pop %v1146
    %v1193 = vrcp.pop %v1149
    %v1194 = vrcp.pop %v1152
    %v1195 = vrcp.pop %v1155
    %v1196 = vrcp.pop %v1158
    %v1197 = vrcp.pop %v1161
    %v1198 = vrcp.pop %v1164
    %v1199 = vrcp.pop %v1167
    %v1200 = vrcp.pop %v1170
    %v1201 = vrcp.pop %v1173
    %v1202 = vrcp.pop %v1176
    %v1203 = vrcp.pop %v1179
    %v1204 = vrcp.pop %v1182
    %v1205 = vrcp.pop %v1185
    %v1206 = vrcp.pop %v1188
    %v1207 = vrcp.pop %v1191
    %v1208 = vmul.f32 %v1113, %v1192
    %v1209 = vmul.f32 %v1115, %v1193
    %v1210 = vmul.f32 %v1117, %v1194
    %v1211 = vmul.f32 %v1119, %v1195
    %v1212 = vmul.f32 %v1121, %v1196
    %v1213 = vmul.f32 %v1123, %v1197
    %v1214 = vmul.f32 %v1125, %v1198
    %v1215 = vmul.f32 %v1127, %v1199
    %v1216 = vmul.f32 %v1129, %v1200
    %v1217 = vmul.f32 %v1131, %v1201
    %v1218 = vmul.f32 %v1133, %v1202
    %v1219 = vmul.f32 %v1135, %v1203
    %v1220 = vmul.f32 %v1137, %v1204
    %v1221 = vmul.f32 %v1139, %v1205
    %v1222 = vmul.f32 %v1141, %v1206
    %v1223 = vmul.f32 %v1143, %v1207
    %v1224 = vpack.c.bf16 %v1209, %v1208
    %v1225 = vpack.c.bf16 %v1211, %v1210
    %v1226 = vpack.c.bf16 %v1213, %v1212
    %v1227 = vpack.c.bf16 %v1215, %v1214
    %v1228 = vpack.c.bf16 %v1217, %v1216
    %v1229 = vpack.c.bf16 %v1219, %v1218
    %v1230 = vpack.c.bf16 %v1221, %v1220
    %v1231 = vpack.c.bf16 %v1223, %v1222
    %1236 = vrot.lane.b32.xlu0 %v264, 96
    %v1237 = vpop.permute.xlu0 %1236
    %1238 = vrot.lane.b32.xlu0 %v266, 96
    %v1239 = vpop.permute.xlu0 %1238
    %1240 = vrot.lane.b32.xlu0 %v268, 96
    %v1241 = vpop.permute.xlu0 %1240
    %1242 = vrot.lane.b32.xlu0 %v270, 96
    %v1243 = vpop.permute.xlu0 %1242
    %v1249 = vsel %vm490, %v1224, 0
    %v1252 = vsel %vm490, %v1225, 0
    %v1255 = vsel %vm490, %v1226, 0
    %v1258 = vsel %vm490, %v1227, 0
    %1260 = vmatprep.subr.bf16.mxu0 0
    %1261 = vmatpush1.bf16.msra.mxu0 %v1237
    %1262 = vmatprep.subr.bf16.mxu0 0
    %1263 = vmatpush1.bf16.msra.mxu0 %v1239
    %1264 = vmatprep.subr.bf16.mxu0 0
    %1265 = vmatpush1.bf16.msra.mxu0 %v1241
    %1266 = vmatprep.subr.bf16.mxu0 0
    %1267 = vmatpush1.bf16.msra.mxu0 %v1243
    %1268 = vmatprep.subr.bf16.mxu0 0
    %1269 = vmatpush1.bf16.msra.mxu0 0
    %1270 = vmatprep.subr.bf16.mxu0 0
    %1271 = vmatpush1.bf16.msra.mxu0 0
    %1272 = vmatprep.subr.bf16.mxu0 0
    %1273 = vmatpush1.bf16.msra.mxu0 0
    %1274 = vmatprep.subr.bf16.mxu0 0
    %1275 = vmatpush1.bf16.msra.mxu0 0
    %1276 = vmatprep.subr.bf16.mxu0 0
    %1277 = vmatpush1.bf16.msra.mxu0 0
    %1278 = vmatprep.subr.bf16.mxu0 0
    %1279 = vmatpush1.bf16.msra.mxu0 0
    %1280 = vmatprep.subr.bf16.mxu0 0
    %1281 = vmatpush1.bf16.msra.mxu0 0
    %1282 = vmatprep.subr.bf16.mxu0 0
    %1283 = vmatpush1.bf16.msra.mxu0 0
    %1284 = vmatprep.subr.bf16.mxu0 0
    %1285 = vmatpush1.bf16.msra.mxu0 0
    %1286 = vmatprep.subr.bf16.mxu0 0
    %1287 = vmatpush1.bf16.msra.mxu0 0
    %1288 = vmatprep.subr.bf16.mxu0 0
    %1289 = vmatpush1.bf16.msra.mxu0 0
    %1290 = vmatprep.subr.bf16.mxu0 0
    %1291 = vmatpush1.bf16.msra.mxu0 0
    %1292 = vmatprep.mubr.bf16.mxu0 0
    %1293 = vmatmul.mubr.bf16.gmra.mrb[0].mxu0 %v1249
    %v1294 = vpop.f32.mrb[0].mxu0
    %v1295 = vadd.f32 0.0, %v1294
    %v1296 = vpop.f32.mrb[0].mxu0
    %v1297 = vpop.f32.mrb[0].mxu0
    %v1298 = vadd.f32 0.0, %v1297
    %v1299 = vpop.f32.mrb[0].mxu0
    %1300 = vmatprep.mubr.bf16.mxu0 0
    %1301 = vmatmul.mubr.bf16.gmra.mrb[0].mxu0 %v1252
    %v1302 = vpop.f32.mrb[0].mxu0
    %v1303 = vadd.f32 0.0, %v1302
    %v1304 = vpop.f32.mrb[0].mxu0
    %v1305 = vpop.f32.mrb[0].mxu0
    %v1306 = vadd.f32 0.0, %v1305
    %v1307 = vpop.f32.mrb[0].mxu0
    %1308 = vmatprep.mubr.bf16.mxu0 0
    %1309 = vmatmul.mubr.bf16.gmra.mrb[0].mxu0 %v1255
    %v1310 = vpop.f32.mrb[0].mxu0
    %v1311 = vadd.f32 0.0, %v1310
    %v1312 = vpop.f32.mrb[0].mxu0
    %v1313 = vpop.f32.mrb[0].mxu0
    %v1314 = vadd.f32 0.0, %v1313
    %v1315 = vpop.f32.mrb[0].mxu0
    %1316 = vmatprep.mubr.bf16.mxu0 0
    %1317 = vmatmul.mubr.bf16.gmra.mrb[0].mxu0 %v1258
    %v1318 = vpop.f32.mrb[0].mxu0
    %v1319 = vadd.f32 0.0, %v1318
    %v1320 = vpop.f32.mrb[0].mxu0
    %v1321 = vpop.f32.mrb[0].mxu0
    %v1322 = vadd.f32 0.0, %v1321
    %v1323 = vpop.f32.mrb[0].mxu0
    %1324 = vdwg.mxu0
    %1329 = vrot.lane.b32.xlu0 %v272, 96
    %v1330 = vpop.permute.xlu0 %1329
    %1331 = vrot.lane.b32.xlu0 %v274, 96
    %v1332 = vpop.permute.xlu0 %1331
    %1333 = vrot.lane.b32.xlu0 %v276, 96
    %v1334 = vpop.permute.xlu0 %1333
    %1335 = vrot.lane.b32.xlu0 %v278, 96
    %v1336 = vpop.permute.xlu0 %1335
    %v1342 = vsel %vm490, %v1228, 0
    %v1345 = vsel %vm490, %v1229, 0
    %v1348 = vsel %vm490, %v1230, 0
    %v1351 = vsel %vm490, %v1231, 0
    %1353 = vmatprep.subr.bf16.mxu0 0
    %1354 = vmatpush1.bf16.msra.mxu0 %v1330
    %1355 = vmatprep.subr.bf16.mxu0 0
    %1356 = vmatpush1.bf16.msra.mxu0 %v1332
    %1357 = vmatprep.subr.bf16.mxu0 0
    %1358 = vmatpush1.bf16.msra.mxu0 %v1334
    %1359 = vmatprep.subr.bf16.mxu0 0
    %1360 = vmatpush1.bf16.msra.mxu0 %v1336
    %1361 = vmatprep.subr.bf16.mxu0 0
    %1362 = vmatpush1.bf16.msra.mxu0 0
    %1363 = vmatprep.subr.bf16.mxu0 0
    %1364 = vmatpush1.bf16.msra.mxu0 0
    %1365 = vmatprep.subr.bf16.mxu0 0
    %1366 = vmatpush1.bf16.msra.mxu0 0
    %1367 = vmatprep.subr.bf16.mxu0 0
    %1368 = vmatpush1.bf16.msra.mxu0 0
    %1369 = vmatprep.subr.bf16.mxu0 0
    %1370 = vmatpush1.bf16.msra.mxu0 0
    %1371 = vmatprep.subr.bf16.mxu0 0
    %1372 = vmatpush1.bf16.msra.mxu0 0
    %1373 = vmatprep.subr.bf16.mxu0 0
    %1374 = vmatpush1.bf16.msra.mxu0 0
    %1375 = vmatprep.subr.bf16.mxu0 0
    %1376 = vmatpush1.bf16.msra.mxu0 0
    %1377 = vmatprep.subr.bf16.mxu0 0
    %1378 = vmatpush1.bf16.msra.mxu0 0
    %1379 = vmatprep.subr.bf16.mxu0 0
    %1380 = vmatpush1.bf16.msra.mxu0 0
    %1381 = vmatprep.subr.bf16.mxu0 0
    %1382 = vmatpush1.bf16.msra.mxu0 0
    %1383 = vmatprep.subr.bf16.mxu0 0
    %1384 = vmatpush1.bf16.msra.mxu0 0
    %1385 = vmatprep.mubr.bf16.mxu0 0
    %1386 = vmatmul.mubr.bf16.gmra.mrb[0].mxu0 %v1342
    %v1387 = vpop.f32.mrb[0].mxu0
    %v1388 = vadd.f32 0.0, %v1387
    %v1389 = vpop.f32.mrb[0].mxu0
    %v1390 = vpop.f32.mrb[0].mxu0
    %v1391 = vadd.f32 0.0, %v1390
    %v1392 = vpop.f32.mrb[0].mxu0
    %1393 = vmatprep.mubr.bf16.mxu0 0
    %1394 = vmatmul.mubr.bf16.gmra.mrb[0].mxu0 %v1345
    %v1395 = vpop.f32.mrb[0].mxu0
    %v1396 = vadd.f32 0.0, %v1395
    %v1397 = vpop.f32.mrb[0].mxu0
    %v1398 = vpop.f32.mrb[0].mxu0
    %v1399 = vadd.f32 0.0, %v1398
    %v1400 = vpop.f32.mrb[0].mxu0
    %1401 = vmatprep.mubr.bf16.mxu0 0
    %1402 = vmatmul.mubr.bf16.gmra.mrb[0].mxu0 %v1348
    %v1403 = vpop.f32.mrb[0].mxu0
    %v1404 = vadd.f32 0.0, %v1403
    %v1405 = vpop.f32.mrb[0].mxu0
    %v1406 = vpop.f32.mrb[0].mxu0
    %v1407 = vadd.f32 0.0, %v1406
    %v1408 = vpop.f32.mrb[0].mxu0
    %1409 = vmatprep.mubr.bf16.mxu0 0
    %1410 = vmatmul.mubr.bf16.gmra.mrb[0].mxu0 %v1351
    %v1411 = vpop.f32.mrb[0].mxu0
    %v1412 = vadd.f32 0.0, %v1411
    %v1413 = vpop.f32.mrb[0].mxu0
    %v1414 = vpop.f32.mrb[0].mxu0
    %v1415 = vadd.f32 0.0, %v1414
    %v1416 = vpop.f32.mrb[0].mxu0
    %1417 = vdwg.mxu0
    %s1418 = scalar_lea.vmem [#allocation2], 128
    %v1419 = vld [vmem:[%s1418] sm:$0xff]
    %v1420 = vld [vmem:[%s1418 + $0x8] sm:$0xff]
    %v1421 = vld [vmem:[%s1418 + $0x10] sm:$0xff]
    %v1422 = vld [vmem:[%s1418 + $0x18] sm:$0xff]
    %v1423 = vld [vmem:[%s1418 + $0x20] sm:$0xff]
    %v1424 = vld [vmem:[%s1418 + $0x28] sm:$0xff]
    %v1425 = vld [vmem:[%s1418 + $0x30] sm:$0xff]
    %v1426 = vld [vmem:[%s1418 + $0x38] sm:$0xff]
    %1427 = vrot.lane.b32.xlu0 %v263, 96
    %v1428 = vpop.permute.xlu0 %1427
    %1429 = vrot.lane.b32.xlu0 %v265, 96
    %v1430 = vpop.permute.xlu0 %1429
    %1431 = vrot.lane.b32.xlu0 %v267, 96
    %v1432 = vpop.permute.xlu0 %1431
    %1433 = vrot.lane.b32.xlu0 %v269, 96
    %v1434 = vpop.permute.xlu0 %1433
    %1435 = vrot.lane.b32.xlu0 %v263, 32
    %v1436 = vpop.permute.xlu0 %1435
    %1437 = vrot.lane.b32.xlu0 %v265, 32
    %v1438 = vpop.permute.xlu0 %1437
    %1439 = vrot.lane.b32.xlu0 %v267, 32
    %v1440 = vpop.permute.xlu0 %1439
    %1441 = vrot.lane.b32.xlu0 %v269, 32
    %v1442 = vpop.permute.xlu0 %1441
    %v1444 = vsel %vm299, %v1428, 0
    %v1447 = vsel %vm299, %v1430, 0
    %v1450 = vsel %vm299, %v1432, 0
    %v1453 = vsel %vm299, %v1434, 0
    %v1456 = vsel %vm299, %v1436, 0
    %v1459 = vsel %vm299, %v1438, 0
    %v1462 = vsel %vm299, %v1440, 0
    %v1465 = vsel %vm299, %v1442, 0
    %1467 = vmatprep.subr.bf16.mxu0 0
    %1468 = vmatpush1.bf16.xpose.msra.mxu0 %v1456
    %1469 = vmatprep.subr.bf16.mxu0 0
    %1470 = vmatpush1.bf16.xpose.msra.mxu0 %v1459
    %1471 = vmatprep.subr.bf16.mxu0 0
    %1472 = vmatpush1.bf16.xpose.msra.mxu0 %v1462
    %1473 = vmatprep.subr.bf16.mxu0 0
    %1474 = vmatpush1.bf16.xpose.msra.mxu0 %v1465
    %1475 = vmatprep.subr.bf16.mxu0 0
    %1476 = vmatpush1.bf16.xpose.msra.mxu0 0
    %1477 = vmatprep.subr.bf16.mxu0 0
    %1478 = vmatpush1.bf16.xpose.msra.mxu0 0
    %1479 = vmatprep.subr.bf16.mxu0 0
    %1480 = vmatpush1.bf16.xpose.msra.mxu0 0
    %1481 = vmatprep.subr.bf16.mxu0 0
    %1482 = vmatpush1.bf16.xpose.msra.mxu0 0
    %1483 = vmatprep.subr.bf16.mxu0 0
    %1484 = vmatpush1.bf16.xpose.msra.mxu0 0
    %1485 = vmatprep.subr.bf16.mxu0 0
    %1486 = vmatpush1.bf16.xpose.msra.mxu0 0
    %1487 = vmatprep.subr.bf16.mxu0 0
    %1488 = vmatpush1.bf16.xpose.msra.mxu0 0
    %1489 = vmatprep.subr.bf16.mxu0 0
    %1490 = vmatpush1.bf16.xpose.msra.mxu0 0
    %1491 = vmatprep.subr.bf16.mxu0 0
    %1492 = vmatpush1.bf16.xpose.msra.mxu0 0
    %1493 = vmatprep.subr.bf16.mxu0 0
    %1494 = vmatpush1.bf16.xpose.msra.mxu0 0
    %1495 = vmatprep.subr.bf16.mxu0 0
    %1496 = vmatpush1.bf16.xpose.msra.mxu0 0
    %1497 = vmatprep.subr.bf16.mxu0 0
    %1498 = vmatpush1.bf16.xpose.msra.mxu0 0
    %1499 = vmatprep.mubr.bf16.mxu0 0
    %1500 = vmatmul.mubr.bf16.gmra.mrb[0].mxu0 %v1444
    %v1501 = vpop.f32.mrb[0].mxu0
    %v1502 = vadd.f32 %v1419, %v1501
    %v1503 = vpop.f32.mrb[0].mxu0
    %v1504 = vpop.f32.mrb[0].mxu0
    %v1505 = vadd.f32 %v1420, %v1504
    %v1506 = vpop.f32.mrb[0].mxu0
    %1507 = vmatprep.mubr.bf16.mxu0 0
    %1508 = vmatmul.mubr.bf16.gmra.mrb[0].mxu0 %v1447
    %v1509 = vpop.f32.mrb[0].mxu0
    %v1510 = vadd.f32 %v1421, %v1509
    %v1511 = vpop.f32.mrb[0].mxu0
    %v1512 = vpop.f32.mrb[0].mxu0
    %v1513 = vadd.f32 %v1422, %v1512
    %v1514 = vpop.f32.mrb[0].mxu0
    %1515 = vmatprep.mubr.bf16.mxu0 0
    %1516 = vmatmul.mubr.bf16.gmra.mrb[0].mxu0 %v1450
    %v1517 = vpop.f32.mrb[0].mxu0
    %v1518 = vadd.f32 %v1423, %v1517
    %v1519 = vpop.f32.mrb[0].mxu0
    %v1520 = vpop.f32.mrb[0].mxu0
    %v1521 = vadd.f32 %v1424, %v1520
    %v1522 = vpop.f32.mrb[0].mxu0
    %1523 = vmatprep.mubr.bf16.mxu0 0
    %1524 = vmatmul.mubr.bf16.gmra.mrb[0].mxu0 %v1453
    %v1525 = vpop.f32.mrb[0].mxu0
    %v1526 = vadd.f32 %v1425, %v1525
    %v1527 = vpop.f32.mrb[0].mxu0
    %v1528 = vpop.f32.mrb[0].mxu0
    %v1529 = vadd.f32 %v1426, %v1528
    %v1530 = vpop.f32.mrb[0].mxu0
    %1531 = vdwg.mxu0
    %1532 = vrot.lane.b32.xlu0 %v271, 96
    %v1533 = vpop.permute.xlu0 %1532
    %1534 = vrot.lane.b32.xlu0 %v273, 96
    %v1535 = vpop.permute.xlu0 %1534
    %1536 = vrot.lane.b32.xlu0 %v275, 96
    %v1537 = vpop.permute.xlu0 %1536
    %1538 = vrot.lane.b32.xlu0 %v277, 96
    %v1539 = vpop.permute.xlu0 %1538
    %1540 = vrot.lane.b32.xlu0 %v271, 32
    %v1541 = vpop.permute.xlu0 %1540
    %1542 = vrot.lane.b32.xlu0 %v273, 32
    %v1543 = vpop.permute.xlu0 %1542
    %1544 = vrot.lane.b32.xlu0 %v275, 32
    %v1545 = vpop.permute.xlu0 %1544
    %1546 = vrot.lane.b32.xlu0 %v277, 32
    %v1547 = vpop.permute.xlu0 %1546
    %v1549 = vsel %vm299, %v1533, 0
    %v1552 = vsel %vm299, %v1535, 0
    %v1555 = vsel %vm299, %v1537, 0
    %v1558 = vsel %vm299, %v1539, 0
    %v1561 = vsel %vm299, %v1541, 0
    %v1564 = vsel %vm299, %v1543, 0
    %v1567 = vsel %vm299, %v1545, 0
    %v1570 = vsel %vm299, %v1547, 0
    %1572 = vmatprep.subr.bf16.mxu0 0
    %1573 = vmatpush1.bf16.xpose.msra.mxu0 %v1561
    %1574 = vmatprep.subr.bf16.mxu0 0
    %1575 = vmatpush1.bf16.xpose.msra.mxu0 %v1564
    %1576 = vmatprep.subr.bf16.mxu0 0
    %1577 = vmatpush1.bf16.xpose.msra.mxu0 %v1567
    %1578 = vmatprep.subr.bf16.mxu0 0
    %1579 = vmatpush1.bf16.xpose.msra.mxu0 %v1570
    %1580 = vmatprep.subr.bf16.mxu0 0
    %1581 = vmatpush1.bf16.xpose.msra.mxu0 0
    %1582 = vmatprep.subr.bf16.mxu0 0
    %1583 = vmatpush1.bf16.xpose.msra.mxu0 0
    %1584 = vmatprep.subr.bf16.mxu0 0
    %1585 = vmatpush1.bf16.xpose.msra.mxu0 0
    %1586 = vmatprep.subr.bf16.mxu0 0
    %1587 = vmatpush1.bf16.xpose.msra.mxu0 0
    %1588 = vmatprep.subr.bf16.mxu0 0
    %1589 = vmatpush1.bf16.xpose.msra.mxu0 0
    %1590 = vmatprep.subr.bf16.mxu0 0
    %1591 = vmatpush1.bf16.xpose.msra.mxu0 0
    %1592 = vmatprep.subr.bf16.mxu0 0
    %1593 = vmatpush1.bf16.xpose.msra.mxu0 0
    %1594 = vmatprep.subr.bf16.mxu0 0
    %1595 = vmatpush1.bf16.xpose.msra.mxu0 0
    %1596 = vmatprep.subr.bf16.mxu0 0
    %1597 = vmatpush1.bf16.xpose.msra.mxu0 0
    %1598 = vmatprep.subr.bf16.mxu0 0
    %1599 = vmatpush1.bf16.xpose.msra.mxu0 0
    %1600 = vmatprep.subr.bf16.mxu0 0
    %1601 = vmatpush1.bf16.xpose.msra.mxu0 0
    %1602 = vmatprep.subr.bf16.mxu0 0
    %1603 = vmatpush1.bf16.xpose.msra.mxu0 0
    %1604 = vmatprep.mubr.bf16.mxu0 0
    %1605 = vmatmul.mubr.bf16.gmra.mrb[0].mxu0 %v1549
    %v1606 = vpop.f32.mrb[0].mxu0
    %v1607 = vadd.f32 %v1419, %v1606
    %v1608 = vpop.f32.mrb[0].mxu0
    %v1609 = vpop.f32.mrb[0].mxu0
    %v1610 = vadd.f32 %v1420, %v1609
    %v1611 = vpop.f32.mrb[0].mxu0
    %1612 = vmatprep.mubr.bf16.mxu0 0
    %1613 = vmatmul.mubr.bf16.gmra.mrb[0].mxu0 %v1552
    %v1614 = vpop.f32.mrb[0].mxu0
    %v1615 = vadd.f32 %v1421, %v1614
    %v1616 = vpop.f32.mrb[0].mxu0
    %v1617 = vpop.f32.mrb[0].mxu0
    %v1618 = vadd.f32 %v1422, %v1617
    %v1619 = vpop.f32.mrb[0].mxu0
    %1620 = vmatprep.mubr.bf16.mxu0 0
    %1621 = vmatmul.mubr.bf16.gmra.mrb[0].mxu0 %v1555
    %v1622 = vpop.f32.mrb[0].mxu0
    %v1623 = vadd.f32 %v1423, %v1622
    %v1624 = vpop.f32.mrb[0].mxu0
    %v1625 = vpop.f32.mrb[0].mxu0
    %v1626 = vadd.f32 %v1424, %v1625
    %v1627 = vpop.f32.mrb[0].mxu0
    %1628 = vmatprep.mubr.bf16.mxu0 0
    %1629 = vmatmul.mubr.bf16.gmra.mrb[0].mxu0 %v1558
    %v1630 = vpop.f32.mrb[0].mxu0
    %v1631 = vadd.f32 %v1425, %v1630
    %v1632 = vpop.f32.mrb[0].mxu0
    %v1633 = vpop.f32.mrb[0].mxu0
    %v1634 = vadd.f32 %v1426, %v1633
    %v1635 = vpop.f32.mrb[0].mxu0
    %1636 = vdwg.mxu0
    %v1637 = vsel %vm490, %v1502, -inf
    %1638 = vmax.xlane.f32.xlu0 %v1637
    %v1639 = vpop.xlane.xlu0 %1638
    %v1640 = vsel %vm490, %v1505, -inf
    %1641 = vmax.xlane.f32.xlu0 %v1640
    %v1642 = vpop.xlane.xlu0 %1641
    %v1643 = vsel %vm490, %v1510, -inf
    %1644 = vmax.xlane.f32.xlu0 %v1643
    %v1645 = vpop.xlane.xlu0 %1644
    %v1646 = vsel %vm490, %v1513, -inf
    %1647 = vmax.xlane.f32.xlu0 %v1646
    %v1648 = vpop.xlane.xlu0 %1647
    %v1649 = vsel %vm490, %v1518, -inf
    %1650 = vmax.xlane.f32.xlu0 %v1649
    %v1651 = vpop.xlane.xlu0 %1650
    %v1652 = vsel %vm490, %v1521, -inf
    %1653 = vmax.xlane.f32.xlu0 %v1652
    %v1654 = vpop.xlane.xlu0 %1653
    %v1655 = vsel %vm490, %v1526, -inf
    %1656 = vmax.xlane.f32.xlu0 %v1655
    %v1657 = vpop.xlane.xlu0 %1656
    %v1658 = vsel %vm490, %v1529, -inf
    %1659 = vmax.xlane.f32.xlu0 %v1658
    %v1660 = vpop.xlane.xlu0 %1659
    %v1661 = vsel %vm490, %v1607, -inf
    %1662 = vmax.xlane.f32.xlu0 %v1661
    %v1663 = vpop.xlane.xlu0 %1662
    %v1664 = vsel %vm490, %v1610, -inf
    %1665 = vmax.xlane.f32.xlu0 %v1664
    %v1666 = vpop.xlane.xlu0 %1665
    %v1667 = vsel %vm490, %v1615, -inf
    %1668 = vmax.xlane.f32.xlu0 %v1667
    %v1669 = vpop.xlane.xlu0 %1668
    %v1670 = vsel %vm490, %v1618, -inf
    %1671 = vmax.xlane.f32.xlu0 %v1670
    %v1672 = vpop.xlane.xlu0 %1671
    %v1673 = vsel %vm490, %v1623, -inf
    %1674 = vmax.xlane.f32.xlu0 %v1673
    %v1675 = vpop.xlane.xlu0 %1674
    %v1676 = vsel %vm490, %v1626, -inf
    %1677 = vmax.xlane.f32.xlu0 %v1676
    %v1678 = vpop.xlane.xlu0 %1677
    %v1679 = vsel %vm490, %v1631, -inf
    %1680 = vmax.xlane.f32.xlu0 %v1679
    %v1681 = vpop.xlane.xlu0 %1680
    %v1682 = vsel %vm490, %v1634, -inf
    %1683 = vmax.xlane.f32.xlu0 %v1682
    %v1684 = vpop.xlane.xlu0 %1683
    %v1685 = vsub.f32 %v1502, %v1639
    %v1686 = vsub.f32 %v1505, %v1642
    %v1687 = vsub.f32 %v1510, %v1645
    %v1688 = vsub.f32 %v1513, %v1648
    %v1689 = vsub.f32 %v1518, %v1651
    %v1690 = vsub.f32 %v1521, %v1654
    %v1691 = vsub.f32 %v1526, %v1657
    %v1692 = vsub.f32 %v1529, %v1660
    %v1693 = vsub.f32 %v1607, %v1663
    %v1694 = vsub.f32 %v1610, %v1666
    %v1695 = vsub.f32 %v1615, %v1669
    %v1696 = vsub.f32 %v1618, %v1672
    %v1697 = vsub.f32 %v1623, %v1675
    %v1698 = vsub.f32 %v1626, %v1678
    %v1699 = vsub.f32 %v1631, %v1681
    %v1700 = vsub.f32 %v1634, %v1684
    %v1701 = vmul.f32 %v1685, 1.442695
    %v1702 = vpow.pop %v1701
    %v1703 = vmul.f32 %v1686, 1.442695
    %v1704 = vpow.pop %v1703
    %v1705 = vmul.f32 %v1687, 1.442695
    %v1706 = vpow.pop %v1705
    %v1707 = vmul.f32 %v1688, 1.442695
    %v1708 = vpow.pop %v1707
    %v1709 = vmul.f32 %v1689, 1.442695
    %v1710 = vpow.pop %v1709
    %v1711 = vmul.f32 %v1690, 1.442695
    %v1712 = vpow.pop %v1711
    %v1713 = vmul.f32 %v1691, 1.442695
    %v1714 = vpow.pop %v1713
    %v1715 = vmul.f32 %v1692, 1.442695
    %v1716 = vpow.pop %v1715
    %v1717 = vmul.f32 %v1693, 1.442695
    %v1718 = vpow.pop %v1717
    %v1719 = vmul.f32 %v1694, 1.442695
    %v1720 = vpow.pop %v1719
    %v1721 = vmul.f32 %v1695, 1.442695
    %v1722 = vpow.pop %v1721
    %v1723 = vmul.f32 %v1696, 1.442695
    %v1724 = vpow.pop %v1723
    %v1725 = vmul.f32 %v1697, 1.442695
    %v1726 = vpow.pop %v1725
    %v1727 = vmul.f32 %v1698, 1.442695
    %v1728 = vpow.pop %v1727
    %v1729 = vmul.f32 %v1699, 1.442695
    %v1730 = vpow.pop %v1729
    %v1731 = vmul.f32 %v1700, 1.442695
    %v1732 = vpow.pop %v1731
    %v1733 = vsel %vm490, %v1702, 0.0
    %1734 = vadd.xlane.f32.xlu0 %v1733
    %v1735 = vpop.xlane.xlu0 %1734
    %v1736 = vsel %vm490, %v1704, 0.0
    %1737 = vadd.xlane.f32.xlu0 %v1736
    %v1738 = vpop.xlane.xlu0 %1737
    %v1739 = vsel %vm490, %v1706, 0.0
    %1740 = vadd.xlane.f32.xlu0 %v1739
    %v1741 = vpop.xlane.xlu0 %1740
    %v1742 = vsel %vm490, %v1708, 0.0
    %1743 = vadd.xlane.f32.xlu0 %v1742
    %v1744 = vpop.xlane.xlu0 %1743
    %v1745 = vsel %vm490, %v1710, 0.0
    %1746 = vadd.xlane.f32.xlu0 %v1745
    %v1747 = vpop.xlane.xlu0 %1746
    %v1748 = vsel %vm490, %v1712, 0.0
    %1749 = vadd.xlane.f32.xlu0 %v1748
    %v1750 = vpop.xlane.xlu0 %1749
    %v1751 = vsel %vm490, %v1714, 0.0
    %1752 = vadd.xlane.f32.xlu0 %v1751
    %v1753 = vpop.xlane.xlu0 %1752
    %v1754 = vsel %vm490, %v1716, 0.0
    %1755 = vadd.xlane.f32.xlu0 %v1754
    %v1756 = vpop.xlane.xlu0 %1755
    %v1757 = vsel %vm490, %v1718, 0.0
    %1758 = vadd.xlane.f32.xlu0 %v1757
    %v1759 = vpop.xlane.xlu0 %1758
    %v1760 = vsel %vm490, %v1720, 0.0
    %1761 = vadd.xlane.f32.xlu0 %v1760
    %v1762 = vpop.xlane.xlu0 %1761
    %v1763 = vsel %vm490, %v1722, 0.0
    %1764 = vadd.xlane.f32.xlu0 %v1763
    %v1765 = vpop.xlane.xlu0 %1764
    %v1766 = vsel %vm490, %v1724, 0.0
    %1767 = vadd.xlane.f32.xlu0 %v1766
    %v1768 = vpop.xlane.xlu0 %1767
    %v1769 = vsel %vm490, %v1726, 0.0
    %1770 = vadd.xlane.f32.xlu0 %v1769
    %v1771 = vpop.xlane.xlu0 %1770
    %v1772 = vsel %vm490, %v1728, 0.0
    %1773 = vadd.xlane.f32.xlu0 %v1772
    %v1774 = vpop.xlane.xlu0 %1773
    %v1775 = vsel %vm490, %v1730, 0.0
    %1776 = vadd.xlane.f32.xlu0 %v1775
    %v1777 = vpop.xlane.xlu0 %1776
    %v1778 = vsel %vm490, %v1732, 0.0
    %1779 = vadd.xlane.f32.xlu0 %v1778
    %v1780 = vpop.xlane.xlu0 %1779
    %v1781 = vrcp.pop %v1735
    %v1782 = vrcp.pop %v1738
    %v1783 = vrcp.pop %v1741
    %v1784 = vrcp.pop %v1744
    %v1785 = vrcp.pop %v1747
    %v1786 = vrcp.pop %v1750
    %v1787 = vrcp.pop %v1753
    %v1788 = vrcp.pop %v1756
    %v1789 = vrcp.pop %v1759
    %v1790 = vrcp.pop %v1762
    %v1791 = vrcp.pop %v1765
    %v1792 = vrcp.pop %v1768
    %v1793 = vrcp.pop %v1771
    %v1794 = vrcp.pop %v1774
    %v1795 = vrcp.pop %v1777
    %v1796 = vrcp.pop %v1780
    %v1797 = vmul.f32 %v1702, %v1781
    %v1798 = vmul.f32 %v1704, %v1782
    %v1799 = vmul.f32 %v1706, %v1783
    %v1800 = vmul.f32 %v1708, %v1784
    %v1801 = vmul.f32 %v1710, %v1785
    %v1802 = vmul.f32 %v1712, %v1786
    %v1803 = vmul.f32 %v1714, %v1787
    %v1804 = vmul.f32 %v1716, %v1788
    %v1805 = vmul.f32 %v1718, %v1789
    %v1806 = vmul.f32 %v1720, %v1790
    %v1807 = vmul.f32 %v1722, %v1791
    %v1808 = vmul.f32 %v1724, %v1792
    %v1809 = vmul.f32 %v1726, %v1793
    %v1810 = vmul.f32 %v1728, %v1794
    %v1811 = vmul.f32 %v1730, %v1795
    %v1812 = vmul.f32 %v1732, %v1796
    %v1813 = vpack.c.bf16 %v1798, %v1797
    %v1814 = vpack.c.bf16 %v1800, %v1799
    %v1815 = vpack.c.bf16 %v1802, %v1801
    %v1816 = vpack.c.bf16 %v1804, %v1803
    %v1817 = vpack.c.bf16 %v1806, %v1805
    %v1818 = vpack.c.bf16 %v1808, %v1807
    %v1819 = vpack.c.bf16 %v1810, %v1809
    %v1820 = vpack.c.bf16 %v1812, %v1811
    %1821 = vrot.lane.b32.xlu0 %v264, 64
    %v1822 = vpop.permute.xlu0 %1821
    %1823 = vrot.lane.b32.xlu0 %v266, 64
    %v1824 = vpop.permute.xlu0 %1823
    %1825 = vrot.lane.b32.xlu0 %v268, 64
    %v1826 = vpop.permute.xlu0 %1825
    %1827 = vrot.lane.b32.xlu0 %v270, 64
    %v1828 = vpop.permute.xlu0 %1827
    %v1834 = vsel %vm490, %v1813, 0
    %v1837 = vsel %vm490, %v1814, 0
    %v1840 = vsel %vm490, %v1815, 0
    %v1843 = vsel %vm490, %v1816, 0
    %1845 = vmatprep.subr.bf16.mxu0 0
    %1846 = vmatpush1.bf16.msra.mxu0 %v1822
    %1847 = vmatprep.subr.bf16.mxu0 0
    %1848 = vmatpush1.bf16.msra.mxu0 %v1824
    %1849 = vmatprep.subr.bf16.mxu0 0
    %1850 = vmatpush1.bf16.msra.mxu0 %v1826
    %1851 = vmatprep.subr.bf16.mxu0 0
    %1852 = vmatpush1.bf16.msra.mxu0 %v1828
    %1853 = vmatprep.subr.bf16.mxu0 0
    %1854 = vmatpush1.bf16.msra.mxu0 0
    %1855 = vmatprep.subr.bf16.mxu0 0
    %1856 = vmatpush1.bf16.msra.mxu0 0
    %1857 = vmatprep.subr.bf16.mxu0 0
    %1858 = vmatpush1.bf16.msra.mxu0 0
    %1859 = vmatprep.subr.bf16.mxu0 0
    %1860 = vmatpush1.bf16.msra.mxu0 0
    %1861 = vmatprep.subr.bf16.mxu0 0
    %1862 = vmatpush1.bf16.msra.mxu0 0
    %1863 = vmatprep.subr.bf16.mxu0 0
    %1864 = vmatpush1.bf16.msra.mxu0 0
    %1865 = vmatprep.subr.bf16.mxu0 0
    %1866 = vmatpush1.bf16.msra.mxu0 0
    %1867 = vmatprep.subr.bf16.mxu0 0
    %1868 = vmatpush1.bf16.msra.mxu0 0
    %1869 = vmatprep.subr.bf16.mxu0 0
    %1870 = vmatpush1.bf16.msra.mxu0 0
    %1871 = vmatprep.subr.bf16.mxu0 0
    %1872 = vmatpush1.bf16.msra.mxu0 0
    %1873 = vmatprep.subr.bf16.mxu0 0
    %1874 = vmatpush1.bf16.msra.mxu0 0
    %1875 = vmatprep.subr.bf16.mxu0 0
    %1876 = vmatpush1.bf16.msra.mxu0 0
    %1877 = vmatprep.mubr.bf16.mxu0 0
    %1878 = vmatmul.mubr.bf16.gmra.mrb[0].mxu0 %v1834
    %v1879 = vpop.f32.mrb[0].mxu0
    %v1880 = vadd.f32 0.0, %v1879
    %v1881 = vpop.f32.mrb[0].mxu0
    %v1882 = vpop.f32.mrb[0].mxu0
    %v1883 = vadd.f32 0.0, %v1882
    %v1884 = vpop.f32.mrb[0].mxu0
    %1885 = vmatprep.mubr.bf16.mxu0 0
    %1886 = vmatmul.mubr.bf16.gmra.mrb[0].mxu0 %v1837
    %v1887 = vpop.f32.mrb[0].mxu0
    %v1888 = vadd.f32 0.0, %v1887
    %v1889 = vpop.f32.mrb[0].mxu0
    %v1890 = vpop.f32.mrb[0].mxu0
    %v1891 = vadd.f32 0.0, %v1890
    %v1892 = vpop.f32.mrb[0].mxu0
    %1893 = vmatprep.mubr.bf16.mxu0 0
    %1894 = vmatmul.mubr.bf16.gmra.mrb[0].mxu0 %v1840
    %v1895 = vpop.f32.mrb[0].mxu0
    %v1896 = vadd.f32 0.0, %v1895
    %v1897 = vpop.f32.mrb[0].mxu0
    %v1898 = vpop.f32.mrb[0].mxu0
    %v1899 = vadd.f32 0.0, %v1898
    %v1900 = vpop.f32.mrb[0].mxu0
    %1901 = vmatprep.mubr.bf16.mxu0 0
    %1902 = vmatmul.mubr.bf16.gmra.mrb[0].mxu0 %v1843
    %v1903 = vpop.f32.mrb[0].mxu0
    %v1904 = vadd.f32 0.0, %v1903
    %v1905 = vpop.f32.mrb[0].mxu0
    %v1906 = vpop.f32.mrb[0].mxu0
    %v1907 = vadd.f32 0.0, %v1906
    %v1908 = vpop.f32.mrb[0].mxu0
    %1909 = vdwg.mxu0
    %1910 = vrot.lane.b32.xlu0 %v272, 64
    %v1911 = vpop.permute.xlu0 %1910
    %1912 = vrot.lane.b32.xlu0 %v274, 64
    %v1913 = vpop.permute.xlu0 %1912
    %1914 = vrot.lane.b32.xlu0 %v276, 64
    %v1915 = vpop.permute.xlu0 %1914
    %1916 = vrot.lane.b32.xlu0 %v278, 64
    %v1917 = vpop.permute.xlu0 %1916
    %v1923 = vsel %vm490, %v1817, 0
    %v1926 = vsel %vm490, %v1818, 0
    %v1929 = vsel %vm490, %v1819, 0
    %v1932 = vsel %vm490, %v1820, 0
    %1934 = vmatprep.subr.bf16.mxu0 0
    %1935 = vmatpush1.bf16.msra.mxu0 %v1911
    %1936 = vmatprep.subr.bf16.mxu0 0
    %1937 = vmatpush1.bf16.msra.mxu0 %v1913
    %1938 = vmatprep.subr.bf16.mxu0 0
    %1939 = vmatpush1.bf16.msra.mxu0 %v1915
    %1940 = vmatprep.subr.bf16.mxu0 0
    %1941 = vmatpush1.bf16.msra.mxu0 %v1917
    %1942 = vmatprep.subr.bf16.mxu0 0
    %1943 = vmatpush1.bf16.msra.mxu0 0
    %1944 = vmatprep.subr.bf16.mxu0 0
    %1945 = vmatpush1.bf16.msra.mxu0 0
    %1946 = vmatprep.subr.bf16.mxu0 0
    %1947 = vmatpush1.bf16.msra.mxu0 0
    %1948 = vmatprep.subr.bf16.mxu0 0
    %1949 = vmatpush1.bf16.msra.mxu0 0
    %1950 = vmatprep.subr.bf16.mxu0 0
    %1951 = vmatpush1.bf16.msra.mxu0 0
    %1952 = vmatprep.subr.bf16.mxu0 0
    %1953 = vmatpush1.bf16.msra.mxu0 0
    %1954 = vmatprep.subr.bf16.mxu0 0
    %1955 = vmatpush1.bf16.msra.mxu0 0
    %1956 = vmatprep.subr.bf16.mxu0 0
    %1957 = vmatpush1.bf16.msra.mxu0 0
    %1958 = vmatprep.subr.bf16.mxu0 0
    %1959 = vmatpush1.bf16.msra.mxu0 0
    %1960 = vmatprep.subr.bf16.mxu0 0
    %1961 = vmatpush1.bf16.msra.mxu0 0
    %1962 = vmatprep.subr.bf16.mxu0 0
    %1963 = vmatpush1.bf16.msra.mxu0 0
    %1964 = vmatprep.subr.bf16.mxu0 0
    %1965 = vmatpush1.bf16.msra.mxu0 0
    %1966 = vmatprep.mubr.bf16.mxu0 0
    %1967 = vmatmul.mubr.bf16.gmra.mrb[0].mxu0 %v1923
    %v1968 = vpop.f32.mrb[0].mxu0
    %v1969 = vadd.f32 0.0, %v1968
    %v1970 = vpop.f32.mrb[0].mxu0
    %v1971 = vpop.f32.mrb[0].mxu0
    %v1972 = vadd.f32 0.0, %v1971
    %v1973 = vpop.f32.mrb[0].mxu0
    %1974 = vmatprep.mubr.bf16.mxu0 0
    %1975 = vmatmul.mubr.bf16.gmra.mrb[0].mxu0 %v1926
    %v1976 = vpop.f32.mrb[0].mxu0
    %v1977 = vadd.f32 0.0, %v1976
    %v1978 = vpop.f32.mrb[0].mxu0
    %v1979 = vpop.f32.mrb[0].mxu0
    %v1980 = vadd.f32 0.0, %v1979
    %v1981 = vpop.f32.mrb[0].mxu0
    %1982 = vmatprep.mubr.bf16.mxu0 0
    %1983 = vmatmul.mubr.bf16.gmra.mrb[0].mxu0 %v1929
    %v1984 = vpop.f32.mrb[0].mxu0
    %v1985 = vadd.f32 0.0, %v1984
    %v1986 = vpop.f32.mrb[0].mxu0
    %v1987 = vpop.f32.mrb[0].mxu0
    %v1988 = vadd.f32 0.0, %v1987
    %v1989 = vpop.f32.mrb[0].mxu0
    %1990 = vmatprep.mubr.bf16.mxu0 0
    %1991 = vmatmul.mubr.bf16.gmra.mrb[0].mxu0 %v1932
    %v1992 = vpop.f32.mrb[0].mxu0
    %v1993 = vadd.f32 0.0, %v1992
    %v1994 = vpop.f32.mrb[0].mxu0
    %v1995 = vpop.f32.mrb[0].mxu0
    %v1996 = vadd.f32 0.0, %v1995
    %v1997 = vpop.f32.mrb[0].mxu0
    %1998 = vdwg.mxu0
    %s1999 = scalar_lea.vmem [#allocation2], 192
    %v2000 = vld [vmem:[%s1999] sm:$0xff]
    %v2001 = vld [vmem:[%s1999 + $0x8] sm:$0xff]
    %v2002 = vld [vmem:[%s1999 + $0x10] sm:$0xff]
    %v2003 = vld [vmem:[%s1999 + $0x18] sm:$0xff]
    %v2004 = vld [vmem:[%s1999 + $0x20] sm:$0xff]
    %v2005 = vld [vmem:[%s1999 + $0x28] sm:$0xff]
    %v2006 = vld [vmem:[%s1999 + $0x30] sm:$0xff]
    %v2007 = vld [vmem:[%s1999 + $0x38] sm:$0xff]
    %2008 = vrot.lane.b32.xlu0 %v263, 80
    %v2009 = vpop.permute.xlu0 %2008
    %2010 = vrot.lane.b32.xlu0 %v265, 80
    %v2011 = vpop.permute.xlu0 %2010
    %2012 = vrot.lane.b32.xlu0 %v267, 80
    %v2013 = vpop.permute.xlu0 %2012
    %2014 = vrot.lane.b32.xlu0 %v269, 80
    %v2015 = vpop.permute.xlu0 %2014
    %2016 = vrot.lane.b32.xlu0 %v263, 16
    %v2017 = vpop.permute.xlu0 %2016
    %2018 = vrot.lane.b32.xlu0 %v265, 16
    %v2019 = vpop.permute.xlu0 %2018
    %2020 = vrot.lane.b32.xlu0 %v267, 16
    %v2021 = vpop.permute.xlu0 %2020
    %2022 = vrot.lane.b32.xlu0 %v269, 16
    %v2023 = vpop.permute.xlu0 %2022
    %v2025 = vsel %vm299, %v2009, 0
    %v2028 = vsel %vm299, %v2011, 0
    %v2031 = vsel %vm299, %v2013, 0
    %v2034 = vsel %vm299, %v2015, 0
    %v2037 = vsel %vm299, %v2017, 0
    %v2040 = vsel %vm299, %v2019, 0
    %v2043 = vsel %vm299, %v2021, 0
    %v2046 = vsel %vm299, %v2023, 0
    %2048 = vmatprep.subr.bf16.mxu0 0
    %2049 = vmatpush1.bf16.xpose.msra.mxu0 %v2037
    %2050 = vmatprep.subr.bf16.mxu0 0
    %2051 = vmatpush1.bf16.xpose.msra.mxu0 %v2040
    %2052 = vmatprep.subr.bf16.mxu0 0
    %2053 = vmatpush1.bf16.xpose.msra.mxu0 %v2043
    %2054 = vmatprep.subr.bf16.mxu0 0
    %2055 = vmatpush1.bf16.xpose.msra.mxu0 %v2046
    %2056 = vmatprep.subr.bf16.mxu0 0
    %2057 = vmatpush1.bf16.xpose.msra.mxu0 0
    %2058 = vmatprep.subr.bf16.mxu0 0
    %2059 = vmatpush1.bf16.xpose.msra.mxu0 0
    %2060 = vmatprep.subr.bf16.mxu0 0
    %2061 = vmatpush1.bf16.xpose.msra.mxu0 0
    %2062 = vmatprep.subr.bf16.mxu0 0
    %2063 = vmatpush1.bf16.xpose.msra.mxu0 0
    %2064 = vmatprep.subr.bf16.mxu0 0
    %2065 = vmatpush1.bf16.xpose.msra.mxu0 0
    %2066 = vmatprep.subr.bf16.mxu0 0
    %2067 = vmatpush1.bf16.xpose.msra.mxu0 0
    %2068 = vmatprep.subr.bf16.mxu0 0
    %2069 = vmatpush1.bf16.xpose.msra.mxu0 0
    %2070 = vmatprep.subr.bf16.mxu0 0
    %2071 = vmatpush1.bf16.xpose.msra.mxu0 0
    %2072 = vmatprep.subr.bf16.mxu0 0
    %2073 = vmatpush1.bf16.xpose.msra.mxu0 0
    %2074 = vmatprep.subr.bf16.mxu0 0
    %2075 = vmatpush1.bf16.xpose.msra.mxu0 0
    %2076 = vmatprep.subr.bf16.mxu0 0
    %2077 = vmatpush1.bf16.xpose.msra.mxu0 0
    %2078 = vmatprep.subr.bf16.mxu0 0
    %2079 = vmatpush1.bf16.xpose.msra.mxu0 0
    %2080 = vmatprep.mubr.bf16.mxu0 0
    %2081 = vmatmul.mubr.bf16.gmra.mrb[0].mxu0 %v2025
    %v2082 = vpop.f32.mrb[0].mxu0
    %v2083 = vadd.f32 %v2000, %v2082
    %v2084 = vpop.f32.mrb[0].mxu0
    %v2085 = vpop.f32.mrb[0].mxu0
    %v2086 = vadd.f32 %v2001, %v2085
    %v2087 = vpop.f32.mrb[0].mxu0
    %2088 = vmatprep.mubr.bf16.mxu0 0
    %2089 = vmatmul.mubr.bf16.gmra.mrb[0].mxu0 %v2028
    %v2090 = vpop.f32.mrb[0].mxu0
    %v2091 = vadd.f32 %v2002, %v2090
    %v2092 = vpop.f32.mrb[0].mxu0
    %v2093 = vpop.f32.mrb[0].mxu0
    %v2094 = vadd.f32 %v2003, %v2093
    %v2095 = vpop.f32.mrb[0].mxu0
    %2096 = vmatprep.mubr.bf16.mxu0 0
    %2097 = vmatmul.mubr.bf16.gmra.mrb[0].mxu0 %v2031
    %v2098 = vpop.f32.mrb[0].mxu0
    %v2099 = vadd.f32 %v2004, %v2098
    %v2100 = vpop.f32.mrb[0].mxu0
    %v2101 = vpop.f32.mrb[0].mxu0
    %v2102 = vadd.f32 %v2005, %v2101
    %v2103 = vpop.f32.mrb[0].mxu0
    %2104 = vmatprep.mubr.bf16.mxu0 0
    %2105 = vmatmul.mubr.bf16.gmra.mrb[0].mxu0 %v2034
    %v2106 = vpop.f32.mrb[0].mxu0
    %v2107 = vadd.f32 %v2006, %v2106
    %v2108 = vpop.f32.mrb[0].mxu0
    %v2109 = vpop.f32.mrb[0].mxu0
    %v2110 = vadd.f32 %v2007, %v2109
    %v2111 = vpop.f32.mrb[0].mxu0
    %2112 = vdwg.mxu0
    %2113 = vrot.lane.b32.xlu0 %v271, 80
    %v2114 = vpop.permute.xlu0 %2113
    %2115 = vrot.lane.b32.xlu0 %v273, 80
    %v2116 = vpop.permute.xlu0 %2115
    %2117 = vrot.lane.b32.xlu0 %v275, 80
    %v2118 = vpop.permute.xlu0 %2117
    %2119 = vrot.lane.b32.xlu0 %v277, 80
    %v2120 = vpop.permute.xlu0 %2119
    %2121 = vrot.lane.b32.xlu0 %v271, 16
    %v2122 = vpop.permute.xlu0 %2121
    %2123 = vrot.lane.b32.xlu0 %v273, 16
    %v2124 = vpop.permute.xlu0 %2123
    %2125 = vrot.lane.b32.xlu0 %v275, 16
    %v2126 = vpop.permute.xlu0 %2125
    %2127 = vrot.lane.b32.xlu0 %v277, 16
    %v2128 = vpop.permute.xlu0 %2127
    %v2130 = vsel %vm299, %v2114, 0
    %v2133 = vsel %vm299, %v2116, 0
    %v2136 = vsel %vm299, %v2118, 0
    %v2139 = vsel %vm299, %v2120, 0
    %v2142 = vsel %vm299, %v2122, 0
    %v2145 = vsel %vm299, %v2124, 0
    %v2148 = vsel %vm299, %v2126, 0
    %v2151 = vsel %vm299, %v2128, 0
    %2153 = vmatprep.subr.bf16.mxu0 0
    %2154 = vmatpush1.bf16.xpose.msra.mxu0 %v2142
    %2155 = vmatprep.subr.bf16.mxu0 0
    %2156 = vmatpush1.bf16.xpose.msra.mxu0 %v2145
    %2157 = vmatprep.subr.bf16.mxu0 0
    %2158 = vmatpush1.bf16.xpose.msra.mxu0 %v2148
    %2159 = vmatprep.subr.bf16.mxu0 0
    %2160 = vmatpush1.bf16.xpose.msra.mxu0 %v2151
    %2161 = vmatprep.subr.bf16.mxu0 0
    %2162 = vmatpush1.bf16.xpose.msra.mxu0 0
    %2163 = vmatprep.subr.bf16.mxu0 0
    %2164 = vmatpush1.bf16.xpose.msra.mxu0 0
    %2165 = vmatprep.subr.bf16.mxu0 0
    %2166 = vmatpush1.bf16.xpose.msra.mxu0 0
    %2167 = vmatprep.subr.bf16.mxu0 0
    %2168 = vmatpush1.bf16.xpose.msra.mxu0 0
    %2169 = vmatprep.subr.bf16.mxu0 0
    %2170 = vmatpush1.bf16.xpose.msra.mxu0 0
    %2171 = vmatprep.subr.bf16.mxu0 0
    %2172 = vmatpush1.bf16.xpose.msra.mxu0 0
    %2173 = vmatprep.subr.bf16.mxu0 0
    %2174 = vmatpush1.bf16.xpose.msra.mxu0 0
    %2175 = vmatprep.subr.bf16.mxu0 0
    %2176 = vmatpush1.bf16.xpose.msra.mxu0 0
    %2177 = vmatprep.subr.bf16.mxu0 0
    %2178 = vmatpush1.bf16.xpose.msra.mxu0 0
    %2179 = vmatprep.subr.bf16.mxu0 0
    %2180 = vmatpush1.bf16.xpose.msra.mxu0 0
    %2181 = vmatprep.subr.bf16.mxu0 0
    %2182 = vmatpush1.bf16.xpose.msra.mxu0 0
    %2183 = vmatprep.subr.bf16.mxu0 0
    %2184 = vmatpush1.bf16.xpose.msra.mxu0 0
    %2185 = vmatprep.mubr.bf16.mxu0 0
    %2186 = vmatmul.mubr.bf16.gmra.mrb[0].mxu0 %v2130
    %v2187 = vpop.f32.mrb[0].mxu0
    %v2188 = vadd.f32 %v2000, %v2187
    %v2189 = vpop.f32.mrb[0].mxu0
    %v2190 = vpop.f32.mrb[0].mxu0
    %v2191 = vadd.f32 %v2001, %v2190
    %v2192 = vpop.f32.mrb[0].mxu0
    %2193 = vmatprep.mubr.bf16.mxu0 0
    %2194 = vmatmul.mubr.bf16.gmra.mrb[0].mxu0 %v2133
    %v2195 = vpop.f32.mrb[0].mxu0
    %v2196 = vadd.f32 %v2002, %v2195
    %v2197 = vpop.f32.mrb[0].mxu0
    %v2198 = vpop.f32.mrb[0].mxu0
    %v2199 = vadd.f32 %v2003, %v2198
    %v2200 = vpop.f32.mrb[0].mxu0
    %2201 = vmatprep.mubr.bf16.mxu0 0
    %2202 = vmatmul.mubr.bf16.gmra.mrb[0].mxu0 %v2136
    %v2203 = vpop.f32.mrb[0].mxu0
    %v2204 = vadd.f32 %v2004, %v2203
    %v2205 = vpop.f32.mrb[0].mxu0
    %v2206 = vpop.f32.mrb[0].mxu0
    %v2207 = vadd.f32 %v2005, %v2206
    %v2208 = vpop.f32.mrb[0].mxu0
    %2209 = vmatprep.mubr.bf16.mxu0 0
    %2210 = vmatmul.mubr.bf16.gmra.mrb[0].mxu0 %v2139
    %v2211 = vpop.f32.mrb[0].mxu0
    %v2212 = vadd.f32 %v2006, %v2211
    %v2213 = vpop.f32.mrb[0].mxu0
    %v2214 = vpop.f32.mrb[0].mxu0
    %v2215 = vadd.f32 %v2007, %v2214
    %v2216 = vpop.f32.mrb[0].mxu0
    %2217 = vdwg.mxu0
    %v2218 = vsel %vm490, %v2083, -inf
    %2219 = vmax.xlane.f32.xlu0 %v2218
    %v2220 = vpop.xlane.xlu0 %2219
    %v2221 = vsel %vm490, %v2086, -inf
    %2222 = vmax.xlane.f32.xlu0 %v2221
    %v2223 = vpop.xlane.xlu0 %2222
    %v2224 = vsel %vm490, %v2091, -inf
    %2225 = vmax.xlane.f32.xlu0 %v2224
    %v2226 = vpop.xlane.xlu0 %2225
    %v2227 = vsel %vm490, %v2094, -inf
    %2228 = vmax.xlane.f32.xlu0 %v2227
    %v2229 = vpop.xlane.xlu0 %2228
    %v2230 = vsel %vm490, %v2099, -inf
    %2231 = vmax.xlane.f32.xlu0 %v2230
    %v2232 = vpop.xlane.xlu0 %2231
    %v2233 = vsel %vm490, %v2102, -inf
    %2234 = vmax.xlane.f32.xlu0 %v2233
    %v2235 = vpop.xlane.xlu0 %2234
    %v2236 = vsel %vm490, %v2107, -inf
    %2237 = vmax.xlane.f32.xlu0 %v2236
    %v2238 = vpop.xlane.xlu0 %2237
    %v2239 = vsel %vm490, %v2110, -inf
    %2240 = vmax.xlane.f32.xlu0 %v2239
    %v2241 = vpop.xlane.xlu0 %2240
    %v2242 = vsel %vm490, %v2188, -inf
    %2243 = vmax.xlane.f32.xlu0 %v2242
    %v2244 = vpop.xlane.xlu0 %2243
    %v2245 = vsel %vm490, %v2191, -inf
    %2246 = vmax.xlane.f32.xlu0 %v2245
    %v2247 = vpop.xlane.xlu0 %2246
    %v2248 = vsel %vm490, %v2196, -inf
    %2249 = vmax.xlane.f32.xlu0 %v2248
    %v2250 = vpop.xlane.xlu0 %2249
    %v2251 = vsel %vm490, %v2199, -inf
    %2252 = vmax.xlane.f32.xlu0 %v2251
    %v2253 = vpop.xlane.xlu0 %2252
    %v2254 = vsel %vm490, %v2204, -inf
    %2255 = vmax.xlane.f32.xlu0 %v2254
    %v2256 = vpop.xlane.xlu0 %2255
    %v2257 = vsel %vm490, %v2207, -inf
    %2258 = vmax.xlane.f32.xlu0 %v2257
    %v2259 = vpop.xlane.xlu0 %2258
    %v2260 = vsel %vm490, %v2212, -inf
    %2261 = vmax.xlane.f32.xlu0 %v2260
    %v2262 = vpop.xlane.xlu0 %2261
    %v2263 = vsel %vm490, %v2215, -inf
    %2264 = vmax.xlane.f32.xlu0 %v2263
    %v2265 = vpop.xlane.xlu0 %2264
    %v2266 = vsub.f32 %v2083, %v2220
    %v2267 = vsub.f32 %v2086, %v2223
    %v2268 = vsub.f32 %v2091, %v2226
    %v2269 = vsub.f32 %v2094, %v2229
    %v2270 = vsub.f32 %v2099, %v2232
    %v2271 = vsub.f32 %v2102, %v2235
    %v2272 = vsub.f32 %v2107, %v2238
    %v2273 = vsub.f32 %v2110, %v2241
    %v2274 = vsub.f32 %v2188, %v2244
    %v2275 = vsub.f32 %v2191, %v2247
    %v2276 = vsub.f32 %v2196, %v2250
    %v2277 = vsub.f32 %v2199, %v2253
    %v2278 = vsub.f32 %v2204, %v2256
    %v2279 = vsub.f32 %v2207, %v2259
    %v2280 = vsub.f32 %v2212, %v2262
    %v2281 = vsub.f32 %v2215, %v2265
    %v2282 = vmul.f32 %v2266, 1.442695
    %v2283 = vpow.pop %v2282
    %v2284 = vmul.f32 %v2267, 1.442695
    %v2285 = vpow.pop %v2284
    %v2286 = vmul.f32 %v2268, 1.442695
    %v2287 = vpow.pop %v2286
    %v2288 = vmul.f32 %v2269, 1.442695
    %v2289 = vpow.pop %v2288
    %v2290 = vmul.f32 %v2270, 1.442695
    %v2291 = vpow.pop %v2290
    %v2292 = vmul.f32 %v2271, 1.442695
    %v2293 = vpow.pop %v2292
    %v2294 = vmul.f32 %v2272, 1.442695
    %v2295 = vpow.pop %v2294
    %v2296 = vmul.f32 %v2273, 1.442695
    %v2297 = vpow.pop %v2296
    %v2298 = vmul.f32 %v2274, 1.442695
    %v2299 = vpow.pop %v2298
    %v2300 = vmul.f32 %v2275, 1.442695
    %v2301 = vpow.pop %v2300
    %v2302 = vmul.f32 %v2276, 1.442695
    %v2303 = vpow.pop %v2302
    %v2304 = vmul.f32 %v2277, 1.442695
    %v2305 = vpow.pop %v2304
    %v2306 = vmul.f32 %v2278, 1.442695
    %v2307 = vpow.pop %v2306
    %v2308 = vmul.f32 %v2279, 1.442695
    %v2309 = vpow.pop %v2308
    %v2310 = vmul.f32 %v2280, 1.442695
    %v2311 = vpow.pop %v2310
    %v2312 = vmul.f32 %v2281, 1.442695
    %v2313 = vpow.pop %v2312
    %v2314 = vsel %vm490, %v2283, 0.0
    %2315 = vadd.xlane.f32.xlu0 %v2314
    %v2316 = vpop.xlane.xlu0 %2315
    %v2317 = vsel %vm490, %v2285, 0.0
    %2318 = vadd.xlane.f32.xlu0 %v2317
    %v2319 = vpop.xlane.xlu0 %2318
    %v2320 = vsel %vm490, %v2287, 0.0
    %2321 = vadd.xlane.f32.xlu0 %v2320
    %v2322 = vpop.xlane.xlu0 %2321
    %v2323 = vsel %vm490, %v2289, 0.0
    %2324 = vadd.xlane.f32.xlu0 %v2323
    %v2325 = vpop.xlane.xlu0 %2324
    %v2326 = vsel %vm490, %v2291, 0.0
    %2327 = vadd.xlane.f32.xlu0 %v2326
    %v2328 = vpop.xlane.xlu0 %2327
    %v2329 = vsel %vm490, %v2293, 0.0
    %2330 = vadd.xlane.f32.xlu0 %v2329
    %v2331 = vpop.xlane.xlu0 %2330
    %v2332 = vsel %vm490, %v2295, 0.0
    %2333 = vadd.xlane.f32.xlu0 %v2332
    %v2334 = vpop.xlane.xlu0 %2333
    %v2335 = vsel %vm490, %v2297, 0.0
    %2336 = vadd.xlane.f32.xlu0 %v2335
    %v2337 = vpop.xlane.xlu0 %2336
    %v2338 = vsel %vm490, %v2299, 0.0
    %2339 = vadd.xlane.f32.xlu0 %v2338
    %v2340 = vpop.xlane.xlu0 %2339
    %v2341 = vsel %vm490, %v2301, 0.0
    %2342 = vadd.xlane.f32.xlu0 %v2341
    %v2343 = vpop.xlane.xlu0 %2342
    %v2344 = vsel %vm490, %v2303, 0.0
    %2345 = vadd.xlane.f32.xlu0 %v2344
    %v2346 = vpop.xlane.xlu0 %2345
    %v2347 = vsel %vm490, %v2305, 0.0
    %2348 = vadd.xlane.f32.xlu0 %v2347
    %v2349 = vpop.xlane.xlu0 %2348
    %v2350 = vsel %vm490, %v2307, 0.0
    %2351 = vadd.xlane.f32.xlu0 %v2350
    %v2352 = vpop.xlane.xlu0 %2351
    %v2353 = vsel %vm490, %v2309, 0.0
    %2354 = vadd.xlane.f32.xlu0 %v2353
    %v2355 = vpop.xlane.xlu0 %2354
    %v2356 = vsel %vm490, %v2311, 0.0
    %2357 = vadd.xlane.f32.xlu0 %v2356
    %v2358 = vpop.xlane.xlu0 %2357
    %v2359 = vsel %vm490, %v2313, 0.0
    %2360 = vadd.xlane.f32.xlu0 %v2359
    %v2361 = vpop.xlane.xlu0 %2360
    %v2362 = vrcp.pop %v2316
    %v2363 = vrcp.pop %v2319
    %v2364 = vrcp.pop %v2322
    %v2365 = vrcp.pop %v2325
    %v2366 = vrcp.pop %v2328
    %v2367 = vrcp.pop %v2331
    %v2368 = vrcp.pop %v2334
    %v2369 = vrcp.pop %v2337
    %v2370 = vrcp.pop %v2340
    %v2371 = vrcp.pop %v2343
    %v2372 = vrcp.pop %v2346
    %v2373 = vrcp.pop %v2349
    %v2374 = vrcp.pop %v2352
    %v2375 = vrcp.pop %v2355
    %v2376 = vrcp.pop %v2358
    %v2377 = vrcp.pop %v2361
    %v2378 = vmul.f32 %v2283, %v2362
    %v2379 = vmul.f32 %v2285, %v2363
    %v2380 = vmul.f32 %v2287, %v2364
    %v2381 = vmul.f32 %v2289, %v2365
    %v2382 = vmul.f32 %v2291, %v2366
    %v2383 = vmul.f32 %v2293, %v2367
    %v2384 = vmul.f32 %v2295, %v2368
    %v2385 = vmul.f32 %v2297, %v2369
    %v2386 = vmul.f32 %v2299, %v2370
    %v2387 = vmul.f32 %v2301, %v2371
    %v2388 = vmul.f32 %v2303, %v2372
    %v2389 = vmul.f32 %v2305, %v2373
    %v2390 = vmul.f32 %v2307, %v2374
    %v2391 = vmul.f32 %v2309, %v2375
    %v2392 = vmul.f32 %v2311, %v2376
    %v2393 = vmul.f32 %v2313, %v2377
    %v2394 = vpack.c.bf16 %v2379, %v2378
    %v2395 = vpack.c.bf16 %v2381, %v2380
    %v2396 = vpack.c.bf16 %v2383, %v2382
    %v2397 = vpack.c.bf16 %v2385, %v2384
    %v2398 = vpack.c.bf16 %v2387, %v2386
    %v2399 = vpack.c.bf16 %v2389, %v2388
    %v2400 = vpack.c.bf16 %v2391, %v2390
    %v2401 = vpack.c.bf16 %v2393, %v2392
    %2402 = vrot.lane.b32.xlu0 %v264, 32
    %v2403 = vpop.permute.xlu0 %2402
    %2404 = vrot.lane.b32.xlu0 %v266, 32
    %v2405 = vpop.permute.xlu0 %2404
    %2406 = vrot.lane.b32.xlu0 %v268, 32
    %v2407 = vpop.permute.xlu0 %2406
    %2408 = vrot.lane.b32.xlu0 %v270, 32
    %v2409 = vpop.permute.xlu0 %2408
    %v2415 = vsel %vm490, %v2394, 0
    %v2418 = vsel %vm490, %v2395, 0
    %v2421 = vsel %vm490, %v2396, 0
    %v2424 = vsel %vm490, %v2397, 0
    %2426 = vmatprep.subr.bf16.mxu0 0
    %2427 = vmatpush1.bf16.msra.mxu0 %v2403
    %2428 = vmatprep.subr.bf16.mxu0 0
    %2429 = vmatpush1.bf16.msra.mxu0 %v2405
    %2430 = vmatprep.subr.bf16.mxu0 0
    %2431 = vmatpush1.bf16.msra.mxu0 %v2407
    %2432 = vmatprep.subr.bf16.mxu0 0
    %2433 = vmatpush1.bf16.msra.mxu0 %v2409
    %2434 = vmatprep.subr.bf16.mxu0 0
    %2435 = vmatpush1.bf16.msra.mxu0 0
    %2436 = vmatprep.subr.bf16.mxu0 0
    %2437 = vmatpush1.bf16.msra.mxu0 0
    %2438 = vmatprep.subr.bf16.mxu0 0
    %2439 = vmatpush1.bf16.msra.mxu0 0
    %2440 = vmatprep.subr.bf16.mxu0 0
    %2441 = vmatpush1.bf16.msra.mxu0 0
    %2442 = vmatprep.subr.bf16.mxu0 0
    %2443 = vmatpush1.bf16.msra.mxu0 0
    %2444 = vmatprep.subr.bf16.mxu0 0
    %2445 = vmatpush1.bf16.msra.mxu0 0
    %2446 = vmatprep.subr.bf16.mxu0 0
    %2447 = vmatpush1.bf16.msra.mxu0 0
    %2448 = vmatprep.subr.bf16.mxu0 0
    %2449 = vmatpush1.bf16.msra.mxu0 0
    %2450 = vmatprep.subr.bf16.mxu0 0
    %2451 = vmatpush1.bf16.msra.mxu0 0
    %2452 = vmatprep.subr.bf16.mxu0 0
    %2453 = vmatpush1.bf16.msra.mxu0 0
    %2454 = vmatprep.subr.bf16.mxu0 0
    %2455 = vmatpush1.bf16.msra.mxu0 0
    %2456 = vmatprep.subr.bf16.mxu0 0
    %2457 = vmatpush1.bf16.msra.mxu0 0
    %2458 = vmatprep.mubr.bf16.mxu0 0
    %2459 = vmatmul.mubr.bf16.gmra.mrb[0].mxu0 %v2415
    %v2460 = vpop.f32.mrb[0].mxu0
    %v2461 = vadd.f32 0.0, %v2460
    %v2462 = vpop.f32.mrb[0].mxu0
    %v2463 = vpop.f32.mrb[0].mxu0
    %v2464 = vadd.f32 0.0, %v2463
    %v2465 = vpop.f32.mrb[0].mxu0
    %2466 = vmatprep.mubr.bf16.mxu0 0
    %2467 = vmatmul.mubr.bf16.gmra.mrb[0].mxu0 %v2418
    %v2468 = vpop.f32.mrb[0].mxu0
    %v2469 = vadd.f32 0.0, %v2468
    %v2470 = vpop.f32.mrb[0].mxu0
    %v2471 = vpop.f32.mrb[0].mxu0
    %v2472 = vadd.f32 0.0, %v2471
    %v2473 = vpop.f32.mrb[0].mxu0
    %2474 = vmatprep.mubr.bf16.mxu0 0
    %2475 = vmatmul.mubr.bf16.gmra.mrb[0].mxu0 %v2421
    %v2476 = vpop.f32.mrb[0].mxu0
    %v2477 = vadd.f32 0.0, %v2476
    %v2478 = vpop.f32.mrb[0].mxu0
    %v2479 = vpop.f32.mrb[0].mxu0
    %v2480 = vadd.f32 0.0, %v2479
    %v2481 = vpop.f32.mrb[0].mxu0
    %2482 = vmatprep.mubr.bf16.mxu0 0
    %2483 = vmatmul.mubr.bf16.gmra.mrb[0].mxu0 %v2424
    %v2484 = vpop.f32.mrb[0].mxu0
    %v2485 = vadd.f32 0.0, %v2484
    %v2486 = vpop.f32.mrb[0].mxu0
    %v2487 = vpop.f32.mrb[0].mxu0
    %v2488 = vadd.f32 0.0, %v2487
    %v2489 = vpop.f32.mrb[0].mxu0
    %2490 = vdwg.mxu0
    %2491 = vrot.lane.b32.xlu0 %v272, 32
    %v2492 = vpop.permute.xlu0 %2491
    %2493 = vrot.lane.b32.xlu0 %v274, 32
    %v2494 = vpop.permute.xlu0 %2493
    %2495 = vrot.lane.b32.xlu0 %v276, 32
    %v2496 = vpop.permute.xlu0 %2495
    %2497 = vrot.lane.b32.xlu0 %v278, 32
    %v2498 = vpop.permute.xlu0 %2497
    %v2504 = vsel %vm490, %v2398, 0
    %v2507 = vsel %vm490, %v2399, 0
    %v2510 = vsel %vm490, %v2400, 0
    %v2513 = vsel %vm490, %v2401, 0
    %2515 = vmatprep.subr.bf16.mxu0 0
    %2516 = vmatpush1.bf16.msra.mxu0 %v2492
    %2517 = vmatprep.subr.bf16.mxu0 0
    %2518 = vmatpush1.bf16.msra.mxu0 %v2494
    %2519 = vmatprep.subr.bf16.mxu0 0
    %2520 = vmatpush1.bf16.msra.mxu0 %v2496
    %2521 = vmatprep.subr.bf16.mxu0 0
    %2522 = vmatpush1.bf16.msra.mxu0 %v2498
    %2523 = vmatprep.subr.bf16.mxu0 0
    %2524 = vmatpush1.bf16.msra.mxu0 0
    %2525 = vmatprep.subr.bf16.mxu0 0
    %2526 = vmatpush1.bf16.msra.mxu0 0
    %2527 = vmatprep.subr.bf16.mxu0 0
    %2528 = vmatpush1.bf16.msra.mxu0 0
    %2529 = vmatprep.subr.bf16.mxu0 0
    %2530 = vmatpush1.bf16.msra.mxu0 0
    %2531 = vmatprep.subr.bf16.mxu0 0
    %2532 = vmatpush1.bf16.msra.mxu0 0
    %2533 = vmatprep.subr.bf16.mxu0 0
    %2534 = vmatpush1.bf16.msra.mxu0 0
    %2535 = vmatprep.subr.bf16.mxu0 0
    %2536 = vmatpush1.bf16.msra.mxu0 0
    %2537 = vmatprep.subr.bf16.mxu0 0
    %2538 = vmatpush1.bf16.msra.mxu0 0
    %2539 = vmatprep.subr.bf16.mxu0 0
    %2540 = vmatpush1.bf16.msra.mxu0 0
    %2541 = vmatprep.subr.bf16.mxu0 0
    %2542 = vmatpush1.bf16.msra.mxu0 0
    %2543 = vmatprep.subr.bf16.mxu0 0
    %2544 = vmatpush1.bf16.msra.mxu0 0
    %2545 = vmatprep.subr.bf16.mxu0 0
    %2546 = vmatpush1.bf16.msra.mxu0 0
    %2547 = vmatprep.mubr.bf16.mxu0 0
    %2548 = vmatmul.mubr.bf16.gmra.mrb[0].mxu0 %v2504
    %v2549 = vpop.f32.mrb[0].mxu0
    %v2550 = vadd.f32 0.0, %v2549
    %v2551 = vpop.f32.mrb[0].mxu0
    %v2552 = vpop.f32.mrb[0].mxu0
    %v2553 = vadd.f32 0.0, %v2552
    %v2554 = vpop.f32.mrb[0].mxu0
    %2555 = vmatprep.mubr.bf16.mxu0 0
    %2556 = vmatmul.mubr.bf16.gmra.mrb[0].mxu0 %v2507
    %v2557 = vpop.f32.mrb[0].mxu0
    %v2558 = vadd.f32 0.0, %v2557
    %v2559 = vpop.f32.mrb[0].mxu0
    %v2560 = vpop.f32.mrb[0].mxu0
    %v2561 = vadd.f32 0.0, %v2560
    %v2562 = vpop.f32.mrb[0].mxu0
    %2563 = vmatprep.mubr.bf16.mxu0 0
    %2564 = vmatmul.mubr.bf16.gmra.mrb[0].mxu0 %v2510
    %v2565 = vpop.f32.mrb[0].mxu0
    %v2566 = vadd.f32 0.0, %v2565
    %v2567 = vpop.f32.mrb[0].mxu0
    %v2568 = vpop.f32.mrb[0].mxu0
    %v2569 = vadd.f32 0.0, %v2568
    %v2570 = vpop.f32.mrb[0].mxu0
    %2571 = vmatprep.mubr.bf16.mxu0 0
    %2572 = vmatmul.mubr.bf16.gmra.mrb[0].mxu0 %v2513
    %v2573 = vpop.f32.mrb[0].mxu0
    %v2574 = vadd.f32 0.0, %v2573
    %v2575 = vpop.f32.mrb[0].mxu0
    %v2576 = vpop.f32.mrb[0].mxu0
    %v2577 = vadd.f32 0.0, %v2576
    %v2578 = vpop.f32.mrb[0].mxu0
    %2579 = vdwg.mxu0
    %2596 = vrot.lane.b32.xlu0 %v1295, 32
    %v2597 = vpop.permute.xlu0 %2596
    %2598 = vrot.lane.b32.xlu0 %v1298, 32
    %v2599 = vpop.permute.xlu0 %2598
    %2600 = vrot.lane.b32.xlu0 %v1303, 32
    %v2601 = vpop.permute.xlu0 %2600
    %2602 = vrot.lane.b32.xlu0 %v1306, 32
    %v2603 = vpop.permute.xlu0 %2602
    %2604 = vrot.lane.b32.xlu0 %v1311, 32
    %v2605 = vpop.permute.xlu0 %2604
    %2606 = vrot.lane.b32.xlu0 %v1314, 32
    %v2607 = vpop.permute.xlu0 %2606
    %2608 = vrot.lane.b32.xlu0 %v1319, 32
    %v2609 = vpop.permute.xlu0 %2608
    %2610 = vrot.lane.b32.xlu0 %v1322, 32
    %v2611 = vpop.permute.xlu0 %2610
    %2612 = vrot.lane.b32.xlu0 %v1388, 32
    %v2613 = vpop.permute.xlu0 %2612
    %2614 = vrot.lane.b32.xlu0 %v1391, 32
    %v2615 = vpop.permute.xlu0 %2614
    %2616 = vrot.lane.b32.xlu0 %v1396, 32
    %v2617 = vpop.permute.xlu0 %2616
    %2618 = vrot.lane.b32.xlu0 %v1399, 32
    %v2619 = vpop.permute.xlu0 %2618
    %2620 = vrot.lane.b32.xlu0 %v1404, 32
    %v2621 = vpop.permute.xlu0 %2620
    %2622 = vrot.lane.b32.xlu0 %v1407, 32
    %v2623 = vpop.permute.xlu0 %2622
    %2624 = vrot.lane.b32.xlu0 %v1412, 32
    %v2625 = vpop.permute.xlu0 %2624
    %2626 = vrot.lane.b32.xlu0 %v1415, 32
    %v2627 = vpop.permute.xlu0 %2626
    %2660 = vrot.lane.b32.xlu0 %v1880, 64
    %v2661 = vpop.permute.xlu0 %2660
    %2662 = vrot.lane.b32.xlu0 %v1883, 64
    %v2663 = vpop.permute.xlu0 %2662
    %2664 = vrot.lane.b32.xlu0 %v1888, 64
    %v2665 = vpop.permute.xlu0 %2664
    %2666 = vrot.lane.b32.xlu0 %v1891, 64
    %v2667 = vpop.permute.xlu0 %2666
    %2668 = vrot.lane.b32.xlu0 %v1896, 64
    %v2669 = vpop.permute.xlu0 %2668
    %2670 = vrot.lane.b32.xlu0 %v1899, 64
    %v2671 = vpop.permute.xlu0 %2670
    %2672 = vrot.lane.b32.xlu0 %v1904, 64
    %v2673 = vpop.permute.xlu0 %2672
    %2674 = vrot.lane.b32.xlu0 %v1907, 64
    %v2675 = vpop.permute.xlu0 %2674
    %2676 = vrot.lane.b32.xlu0 %v1969, 64
    %v2677 = vpop.permute.xlu0 %2676
    %2678 = vrot.lane.b32.xlu0 %v1972, 64
    %v2679 = vpop.permute.xlu0 %2678
    %2680 = vrot.lane.b32.xlu0 %v1977, 64
    %v2681 = vpop.permute.xlu0 %2680
    %2682 = vrot.lane.b32.xlu0 %v1980, 64
    %v2683 = vpop.permute.xlu0 %2682
    %2684 = vrot.lane.b32.xlu0 %v1985, 64
    %v2685 = vpop.permute.xlu0 %2684
    %2686 = vrot.lane.b32.xlu0 %v1988, 64
    %v2687 = vpop.permute.xlu0 %2686
    %2688 = vrot.lane.b32.xlu0 %v1993, 64
    %v2689 = vpop.permute.xlu0 %2688
    %2690 = vrot.lane.b32.xlu0 %v1996, 64
    %v2691 = vpop.permute.xlu0 %2690
    %2724 = vrot.lane.b32.xlu0 %v2461, 96
    %v2725 = vpop.permute.xlu0 %2724
    %2726 = vrot.lane.b32.xlu0 %v2464, 96
    %v2727 = vpop.permute.xlu0 %2726
    %2728 = vrot.lane.b32.xlu0 %v2469, 96
    %v2729 = vpop.permute.xlu0 %2728
    %2730 = vrot.lane.b32.xlu0 %v2472, 96
    %v2731 = vpop.permute.xlu0 %2730
    %2732 = vrot.lane.b32.xlu0 %v2477, 96
    %v2733 = vpop.permute.xlu0 %2732
    %2734 = vrot.lane.b32.xlu0 %v2480, 96
    %v2735 = vpop.permute.xlu0 %2734
    %2736 = vrot.lane.b32.xlu0 %v2485, 96
    %v2737 = vpop.permute.xlu0 %2736
    %2738 = vrot.lane.b32.xlu0 %v2488, 96
    %v2739 = vpop.permute.xlu0 %2738
    %2740 = vrot.lane.b32.xlu0 %v2550, 96
    %v2741 = vpop.permute.xlu0 %2740
    %2742 = vrot.lane.b32.xlu0 %v2553, 96
    %v2743 = vpop.permute.xlu0 %2742
    %2744 = vrot.lane.b32.xlu0 %v2558, 96
    %v2745 = vpop.permute.xlu0 %2744
    %2746 = vrot.lane.b32.xlu0 %v2561, 96
    %v2747 = vpop.permute.xlu0 %2746
    %2748 = vrot.lane.b32.xlu0 %v2566, 96
    %v2749 = vpop.permute.xlu0 %2748
    %2750 = vrot.lane.b32.xlu0 %v2569, 96
    %v2751 = vpop.permute.xlu0 %2750
    %2752 = vrot.lane.b32.xlu0 %v2574, 96
    %v2753 = vpop.permute.xlu0 %2752
    %2754 = vrot.lane.b32.xlu0 %v2577, 96
    %v2755 = vpop.permute.xlu0 %2754
    %v2772 = vsel %vm125, %v722, %v2597
    %v2773 = vsel %vm125, %v725, %v2599
    %v2774 = vsel %vm125, %v730, %v2601
    %v2775 = vsel %vm125, %v733, %v2603
    %v2776 = vsel %vm125, %v738, %v2605
    %v2777 = vsel %vm125, %v741, %v2607
    %v2778 = vsel %vm125, %v746, %v2609
    %v2779 = vsel %vm125, %v749, %v2611
    %v2780 = vsel %vm125, %v799, %v2613
    %v2781 = vsel %vm125, %v802, %v2615
    %v2782 = vsel %vm125, %v807, %v2617
    %v2783 = vsel %vm125, %v810, %v2619
    %v2784 = vsel %vm125, %v815, %v2621
    %v2785 = vsel %vm125, %v818, %v2623
    %v2786 = vsel %vm125, %v823, %v2625
    %v2787 = vsel %vm125, %v826, %v2627
    %v2788 = vsel %vm490, %v2772, %v2661
    %v2789 = vsel %vm490, %v2773, %v2663
    %v2790 = vsel %vm490, %v2774, %v2665
    %v2791 = vsel %vm490, %v2775, %v2667
    %v2792 = vsel %vm490, %v2776, %v2669
    %v2793 = vsel %vm490, %v2777, %v2671
    %v2794 = vsel %vm490, %v2778, %v2673
    %v2795 = vsel %vm490, %v2779, %v2675
    %v2796 = vsel %vm490, %v2780, %v2677
    %v2797 = vsel %vm490, %v2781, %v2679
    %v2798 = vsel %vm490, %v2782, %v2681
    %v2799 = vsel %vm490, %v2783, %v2683
    %v2800 = vsel %vm490, %v2784, %v2685
    %v2801 = vsel %vm490, %v2785, %v2687
    %v2802 = vsel %vm490, %v2786, %v2689
    %v2803 = vsel %vm490, %v2787, %v2691
    %vm2804 = vcmask 785408
    %v2805 = vsel %vm2804, %v2788, %v2725
    %v2806 = vsel %vm2804, %v2789, %v2727
    %v2807 = vsel %vm2804, %v2790, %v2729
    %v2808 = vsel %vm2804, %v2791, %v2731
    %v2809 = vsel %vm2804, %v2792, %v2733
    %v2810 = vsel %vm2804, %v2793, %v2735
    %v2811 = vsel %vm2804, %v2794, %v2737
    %v2812 = vsel %vm2804, %v2795, %v2739
    %v2813 = vsel %vm2804, %v2796, %v2741
    %v2814 = vsel %vm2804, %v2797, %v2743
    %v2815 = vsel %vm2804, %v2798, %v2745
    %v2816 = vsel %vm2804, %v2799, %v2747
    %v2817 = vsel %vm2804, %v2800, %v2749
    %v2818 = vsel %vm2804, %v2801, %v2751
    %v2819 = vsel %vm2804, %v2802, %v2753
    %v2820 = vsel %vm2804, %v2803, %v2755
    %v2821 = vadd.f32 %v2805, 3.0
    %v2822 = vadd.f32 %v2806, 3.0
    %v2823 = vadd.f32 %v2807, 3.0
    %v2824 = vadd.f32 %v2808, 3.0
    %v2825 = vadd.f32 %v2809, 3.0
    %v2826 = vadd.f32 %v2810, 3.0
    %v2827 = vadd.f32 %v2811, 3.0
    %v2828 = vadd.f32 %v2812, 3.0
    %v2829 = vadd.f32 %v2813, 3.0
    %v2830 = vadd.f32 %v2814, 3.0
    %v2831 = vadd.f32 %v2815, 3.0
    %v2832 = vadd.f32 %v2816, 3.0
    %v2833 = vadd.f32 %v2817, 3.0
    %v2834 = vadd.f32 %v2818, 3.0
    %v2835 = vadd.f32 %v2819, 3.0
    %v2836 = vadd.f32 %v2820, 3.0
    %v2837 = vmax.f32 %v2821, 0.0
    %v2838 = vmax.f32 %v2822, 0.0
    %v2839 = vmax.f32 %v2823, 0.0
    %v2840 = vmax.f32 %v2824, 0.0
    %v2841 = vmax.f32 %v2825, 0.0
    %v2842 = vmax.f32 %v2826, 0.0
    %v2843 = vmax.f32 %v2827, 0.0
    %v2844 = vmax.f32 %v2828, 0.0
    %v2845 = vmax.f32 %v2829, 0.0
    %v2846 = vmax.f32 %v2830, 0.0
    %v2847 = vmax.f32 %v2831, 0.0
    %v2848 = vmax.f32 %v2832, 0.0
    %v2849 = vmax.f32 %v2833, 0.0
    %v2850 = vmax.f32 %v2834, 0.0
    %v2851 = vmax.f32 %v2835, 0.0
    %v2852 = vmax.f32 %v2836, 0.0
    %v2853 = vmin.f32 %v2837, 6.0
    %v2854 = vmin.f32 %v2838, 6.0
    %v2855 = vmin.f32 %v2839, 6.0
    %v2856 = vmin.f32 %v2840, 6.0
    %v2857 = vmin.f32 %v2841, 6.0
    %v2858 = vmin.f32 %v2842, 6.0
    %v2859 = vmin.f32 %v2843, 6.0
    %v2860 = vmin.f32 %v2844, 6.0
    %v2861 = vmin.f32 %v2845, 6.0
    %v2862 = vmin.f32 %v2846, 6.0
    %v2863 = vmin.f32 %v2847, 6.0
    %v2864 = vmin.f32 %v2848, 6.0
    %v2865 = vmin.f32 %v2849, 6.0
    %v2866 = vmin.f32 %v2850, 6.0
    %v2867 = vmin.f32 %v2851, 6.0
    %v2868 = vmin.f32 %v2852, 6.0
    %v2869 = vmul.f32 %v2805, %v2853
    %v2870 = vmul.f32 %v2806, %v2854
    %v2871 = vmul.f32 %v2807, %v2855
    %v2872 = vmul.f32 %v2808, %v2856
    %v2873 = vmul.f32 %v2809, %v2857
    %v2874 = vmul.f32 %v2810, %v2858
    %v2875 = vmul.f32 %v2811, %v2859
    %v2876 = vmul.f32 %v2812, %v2860
    %v2877 = vmul.f32 %v2813, %v2861
    %v2878 = vmul.f32 %v2814, %v2862
    %v2879 = vmul.f32 %v2815, %v2863
    %v2880 = vmul.f32 %v2816, %v2864
    %v2881 = vmul.f32 %v2817, %v2865
    %v2882 = vmul.f32 %v2818, %v2866
    %v2883 = vmul.f32 %v2819, %v2867
    %v2884 = vmul.f32 %v2820, %v2868
    %v2885 = vmul.f32 %v2869, 0.16666667
    %v2886 = vmul.f32 %v2870, 0.16666667
    %v2887 = vmul.f32 %v2871, 0.16666667
    %v2888 = vmul.f32 %v2872, 0.16666667
    %v2889 = vmul.f32 %v2873, 0.16666667
    %v2890 = vmul.f32 %v2874, 0.16666667
    %v2891 = vmul.f32 %v2875, 0.16666667
    %v2892 = vmul.f32 %v2876, 0.16666667
    %v2893 = vmul.f32 %v2877, 0.16666667
    %v2894 = vmul.f32 %v2878, 0.16666667
    %v2895 = vmul.f32 %v2879, 0.16666667
    %v2896 = vmul.f32 %v2880, 0.16666667
    %v2897 = vmul.f32 %v2881, 0.16666667
    %v2898 = vmul.f32 %v2882, 0.16666667
    %v2899 = vmul.f32 %v2883, 0.16666667
    %v2900 = vmul.f32 %v2884, 0.16666667
    %2901 = vst [vmem:[#allocation5] sm:$0xff] %v2885
    %2902 = vst [vmem:[#allocation5 + $0x8] sm:$0xff] %v2886
    %2903 = vst [vmem:[#allocation5 + $0x10] sm:$0xff] %v2887
    %2904 = vst [vmem:[#allocation5 + $0x18] sm:$0xff] %v2888
    %2905 = vst [vmem:[#allocation5 + $0x20] sm:$0xff] %v2889
    %2906 = vst [vmem:[#allocation5 + $0x28] sm:$0xff] %v2890
    %2907 = vst [vmem:[#allocation5 + $0x30] sm:$0xff] %v2891
    %2908 = vst [vmem:[#allocation5 + $0x38] sm:$0xff] %v2892
    %2909 = vst [vmem:[#allocation5 + $0x40] sm:$0xff] %v2893
    %2910 = vst [vmem:[#allocation5 + $0x48] sm:$0xff] %v2894
    %2911 = vst [vmem:[#allocation5 + $0x50] sm:$0xff] %v2895
    %2912 = vst [vmem:[#allocation5 + $0x58] sm:$0xff] %v2896
    %2913 = vst [vmem:[#allocation5 + $0x60] sm:$0xff] %v2897
    %2914 = vst [vmem:[#allocation5 + $0x68] sm:$0xff] %v2898
    %2915 = vst [vmem:[#allocation5 + $0x70] sm:$0xff] %v2899
    %2916 = vst [vmem:[#allocation5 + $0x78] sm:$0xff] %v2900
    // Predicated region
    $region22: #{tpu_custom_call.1} parent=1 // pred_check
      _
    $region23: #{tpu_custom_call.1} parent=1 // pred_check_branch
      %2918 = sbr.rel (0) target = $region25
    $region24: #{tpu_custom_call.1} parent=1 // pred_region
      %s2920 = ssub.s32 2048, 2048
      %2921 = vsyncadd [#allocation4], %s2920
      %s2922 = sshll.u32 [#allocation5], 4
      %s2923 = int_to_ptr.vmem [resolvable:$true] %s2922
      %2928 = dma.vmem_to_hbm [thread:$0]  %s2923, 2048, %s4, [#allocation4], 128, 128, 8
    $region25: #{tpu_custom_call.1} parent=1 // pred_fallthru
      _
    // Predicated region
    $region26: #{tpu_custom_call.1} parent=1 // pred_check
      _
    $region27: #{tpu_custom_call.1} parent=1 // pred_check_branch
      %2930 = sbr.rel (0) target = $region29
    $region28: #{tpu_custom_call.1} parent=1 // pred_region
      %2931 = dma.done [#allocation4], 2048
    $region29: #{tpu_custom_call.1} parent=1 // pred_fallthru
      _
    %2932 = vsyncpa [#allocation3], 1
    %2933 = vsyncpa [#allocation4], 1

</llo_original>
